<compile_context>
chip_gen: v6e
topology: v6e:2x2x1
jax: 0.10.0
libtpu: 0.0.40
codegen_flags: <defaults>
</compile_context>

<pallas_src>
import math

import jax
import jax.numpy as jnp
from jax.experimental import pallas as pl
from jax.experimental.pallas import tpu as pltpu

Z_SIZE = 50
Z_PAD = 64           # contraction dim of the first matmul, padded to a sublane multiple
H1, H2, H3 = 256, 512, 768
BN_EPS = 1e-5


def _batchnorm(x, gamma, beta):
    # Training-mode BatchNorm1d: stats over the batch axis, biased variance, f32 math.
    mean = jnp.mean(x, axis=0, keepdims=True)
    var = jnp.mean((x - mean) ** 2, axis=0, keepdims=True)
    scale = jax.lax.rsqrt(var + BN_EPS) * gamma   # (1,C) op; saves one (B,C) multiply
    return (x - mean) * scale + beta


def generator_kernel(z_ref, w1_ref, w2_hbm, w3_hbm, gb_ref, out_ref,
                     w2_vmem, w3_vmem, zbuf_ref, dma_sem):
    # Kick off the w2/w3 weight DMAs immediately so they overlap with layer-1
    # (and layer-2) compute instead of serializing in front of the body.
    cp2 = pltpu.make_async_copy(w2_hbm, w2_vmem, dma_sem.at[0])
    cp3 = pltpu.make_async_copy(w3_hbm, w3_vmem, dma_sem.at[1])
    cp2.start()
    cp3.start()

    # Ref-level gamma/beta slices (all lane offsets are 128-aligned); avoids
    # materializing the whole (2, 1536) block.
    g1, be1 = gb_ref[0:1, :H1],            gb_ref[1:2, :H1]
    g2, be2 = gb_ref[0:1, H1:H1 + H2],     gb_ref[1:2, H1:H1 + H2]
    g3, be3 = gb_ref[0:1, H1 + H2:],       gb_ref[1:2, H1 + H2:]

    # z pad 50 -> 64 via zero-initialized VMEM scratch + masked lane store.
    # (w1 rows 50..63 are zero, so the pad region contributes nothing.)
    zbuf_ref[...] = jnp.zeros_like(zbuf_ref)
    zbuf_ref[:, :Z_SIZE] = z_ref[...]
    z = zbuf_ref[...].astype(jnp.bfloat16)

    # Linear biases intentionally omitted: cancelled exactly by the BN mean subtraction.

    # layer1: fc1 -> bn1 -> relu   (bf16 MXU operands, f32 accumulate, f32 BN)
    h = jnp.dot(z, w1_ref[...], preferred_element_type=jnp.float32)
    h = jnp.maximum(_batchnorm(h, g1, be1), 0.0)

    # layer2: fc2 -> bn2 -> relu   (wait for w2 only when it is actually needed)
    cp2.wait()
    h = jnp.dot(h.astype(jnp.bfloat16), w2_vmem[...], preferred_element_type=jnp.float32)
    h = jnp.maximum(_batchnorm(h, g2, be2), 0.0)

    # layer3: fc3 -> bn3 -> tanh
    cp3.wait()
    h = jnp.dot(h.astype(jnp.bfloat16), w3_vmem[...], preferred_element_type=jnp.float32)
    h = jnp.tanh(_batchnorm(h, g3, be3))

    out_ref[...] = h.astype(out_ref.dtype)


def generator_forward(z, params):
    """z: (B, Z_SIZE) f32 (no wrapper-side padding).
    params = (w1, w2, w3) bf16 stored as (in, out), w1 zero-padded to Z_PAD rows,
    plus gb: (2, H1+H2+H3) f32 packed gamma/beta.  Returns (B, H3) bf16."""
    w1, w2, w3, gb = params
    B = z.shape[0]
    assert B > 1, "training-mode BatchNorm needs batch > 1 (same caveat as PyTorch)"

    flops = 2 * B * (Z_PAD * H1 + H1 * H2 + H2 * H3)          # the three matmuls
    bytes_accessed = ((Z_PAD * H1 + H1 * H2 + H2 * H3) * 2    # bf16 weights
                      + gb.size * 4 + B * Z_SIZE * 4 + B * H3 * 2)

    vmem = pl.BlockSpec(memory_space=pltpu.MemorySpace.VMEM)
    hbm = pl.BlockSpec(memory_space=pl.ANY)   # raw HBM refs; DMA'd inside the kernel

    return pl.pallas_call(
        generator_kernel,
        out_shape=jax.ShapeDtypeStruct((B, H3), jnp.bfloat16),
        in_specs=[vmem, vmem, hbm, hbm, vmem],
        out_specs=vmem,
        scratch_shapes=[
            pltpu.VMEM((H1, H2), jnp.bfloat16),   # w2 landing buffer
            pltpu.VMEM((H2, H3), jnp.bfloat16),   # w3 landing buffer
            pltpu.VMEM((B, Z_PAD), jnp.float32),  # zero-padded z staging
            pltpu.SemaphoreType.DMA((2,)),
        ],
        compiler_params=pltpu.CompilerParams(vmem_limit_bytes=4 << 20),
        cost_estimate=pl.CostEstimate(
            flops=flops,
            transcendentals=B * H3 + (H1 + H2 + H3),   # tanh + per-feature rsqrt
            bytes_accessed=bytes_accessed),
    )(z, w1, w2, w3, gb)


def init_params(key):
    """Deterministic init matching the PyTorch module's parameter shapes.
    Linear weights stored transposed as (in, out), cast to bf16 for the kernel.
    Biases are generated only for the fp32 spec reference (they cancel in BN)."""
    ks = jax.random.split(key, 9)

    def linear(kw, kb, fan_in, fan_out, pad_in=None):
        bound = 1.0 / math.sqrt(fan_in)
        w = jax.random.uniform(kw, (fan_in, fan_out), jnp.float32, -bound, bound)
        b = jax.random.uniform(kb, (1, fan_out), jnp.float32, -bound, bound)
        if pad_in is not None and pad_in > fan_in:
            w = jnp.pad(w, ((0, pad_in - fan_in), (0, 0)))
        return w.astype(jnp.bfloat16), b

    w1, b1 = linear(ks[0], ks[1], Z_SIZE, H1, pad_in=Z_PAD)
    w2, b2 = linear(ks[2], ks[3], H1, H2)
    w3, b3 = linear(ks[4], ks[5], H2, H3)

    def bn_affine(k, c):
        # PyTorch default is gamma=1, beta=0; perturb deterministically so the
        # affine path is actually exercised.
        kg, kb = jax.random.split(k)
        g = 1.0 + 0.1 * jax.random.normal(kg, (1, c), jnp.float32)
        be = 0.05 * jax.random.normal(kb, (1, c), jnp.float32)
        return g, be

    g1, be1 = bn_affine(ks[6], H1)
    g2, be2 = bn_affine(ks[7], H2)
    g3, be3 = bn_affine(ks[8], H3)

    gb = jnp.concatenate(
        [jnp.concatenate([g1, g2, g3], axis=1),
         jnp.concatenate([be1, be2, be3], axis=1)], axis=0)  # (2, H1+H2+H3)

    params = (w1, w2, w3, gb)
    biases = (b1, b2, b3)
    return params, biases


def reference_forward_mirror(z, params):
    """Pure-JAX replica of the kernel's exact math (bf16 dot operands, no bias, f32 BN)."""
    w1, w2, w3, gb = params
    g1, be1 = gb[0:1, :H1], gb[1:2, :H1]
    g2, be2 = gb[0:1, H1:H1 + H2], gb[1:2, H1:H1 + H2]
    g3, be3 = gb[0:1, H1 + H2:], gb[1:2, H1 + H2:]
    z_pad = jnp.pad(z, ((0, 0), (0, Z_PAD - Z_SIZE))).astype(jnp.bfloat16)
    h = jnp.dot(z_pad, w1, preferred_element_type=jnp.float32)
    h = jnp.maximum(_batchnorm(h, g1, be1), 0.0)
    h = jnp.dot(h.astype(jnp.bfloat16), w2, preferred_element_type=jnp.float32)
    h = jnp.maximum(_batchnorm(h, g2, be2), 0.0)
    h = jnp.dot(h.astype(jnp.bfloat16), w3, preferred_element_type=jnp.float32)
    return jnp.tanh(_batchnorm(h, g3, be3))


def reference_forward_f32_spec(z, params, biases):
    """fp32 reference matching the PyTorch module (Linear biases included)."""
    w1, w2, w3, gb = params
    b1, b2, b3 = biases
    g1, be1 = gb[0:1, :H1], gb[1:2, :H1]
    g2, be2 = gb[0:1, H1:H1 + H2], gb[1:2, H1:H1 + H2]
    g3, be3 = gb[0:1, H1 + H2:], gb[1:2, H1 + H2:]
    hi = jax.lax.Precision.HIGHEST
    w1f = w1[:Z_SIZE].astype(jnp.float32)
    w2f = w2.astype(jnp.float32)
    w3f = w3.astype(jnp.float32)
    h = jnp.maximum(_batchnorm(jnp.dot(z, w1f, precision=hi) + b1, g1, be1), 0.0)
    h = jnp.maximum(_batchnorm(jnp.dot(h, w2f, precision=hi) + b2, g2, be2), 0.0)
    h = jnp.tanh(_batchnorm(jnp.dot(h, w3f, precision=hi) + b3, g3, be3))
    return h.reshape(z.shape[0], H3)


if __name__ == "__main__":
    key = jax.random.PRNGKey(0)
    k_z, k_p = jax.random.split(key)

    B = 16  # stands in for blca_batch_size
    z = jax.random.normal(k_z, (B, Z_SIZE), jnp.float32)
    params, biases = init_params(k_p)

    out = jax.block_until_ready(generator_forward(z, params))
    assert out.shape == (B, H3), out.shape
    assert out.dtype == jnp.bfloat16, out.dtype
    out_f32 = out.astype(jnp.float32)

    # Tight check: pure-JAX replica of the kernel's exact (bf16-dot, f32-BN) math;
    # the only extra difference is the final bf16 output cast (tanh output in [-1,1]).
    ref = reference_forward_mirror(z, params)
    assert jnp.allclose(out_f32, ref, atol=1e-2, rtol=1e-2), \
        float(jnp.max(jnp.abs(out_f32 - ref)))

    # Loose check against the fp32 PyTorch-semantics reference (with Linear biases):
    # differences are bf16 weights/activation casts; the biases cancel exactly
    # under training-mode BatchNorm.
    ref32 = reference_forward_f32_spec(z, params, biases)
    assert jnp.allclose(out_f32, ref32, atol=2e-1, rtol=2e-1), \
        float(jnp.max(jnp.abs(out_f32 - ref32)))

    print("KERNEL_OK")
</pallas_src>

<mosaic_0001>
module attributes {stable_mosaic.version = 11 : i64} {
  func.func @generator_kernel(%arg0: memref<16x50xf32, #tpu.memory_space<vmem>>, %arg1: memref<64x256xbf16, #tpu.memory_space<vmem>>, %arg2: memref<256x512xbf16, #tpu.memory_space<any>>, %arg3: memref<512x768xbf16, #tpu.memory_space<any>>, %arg4: memref<2x1536xf32, #tpu.memory_space<vmem>>, %arg5: memref<16x768xbf16, #tpu.memory_space<vmem>>, %arg6: memref<256x512xbf16, #tpu.memory_space<vmem>>, %arg7: memref<512x768xbf16, #tpu.memory_space<vmem>>, %arg8: memref<16x64xf32, #tpu.memory_space<vmem>>, %arg9: memref<2x!tpu.dma_semaphore, #tpu.memory_space<semaphore_mem>>) attributes {dimension_semantics = [], scalar_prefetch = 0 : i64, scratch_operands = 4 : i64, tpu.core_type = #tpu.core_type<tc>} {
    %c0_i32 = arith.constant 0 : i32
    %0 = tpu.memref_slice %arg9[%c0_i32] : memref<2x!tpu.dma_semaphore, #tpu.memory_space<semaphore_mem>> -> memref<1x!tpu.dma_semaphore, #tpu.memory_space<semaphore_mem>>
    %1 = tpu.memref_squeeze %0 : memref<1x!tpu.dma_semaphore, #tpu.memory_space<semaphore_mem>> -> memref<!tpu.dma_semaphore, #tpu.memory_space<semaphore_mem>>
    tpu.enqueue_dma source(%arg2 : memref<256x512xbf16, #tpu.memory_space<any>>) target(%arg6 : memref<256x512xbf16, #tpu.memory_space<vmem>>) target_semaphore(%1 : memref<!tpu.dma_semaphore, #tpu.memory_space<semaphore_mem>>)
    %c1_i32 = arith.constant 1 : i32
    %2 = tpu.memref_slice %arg9[%c1_i32] : memref<2x!tpu.dma_semaphore, #tpu.memory_space<semaphore_mem>> -> memref<1x!tpu.dma_semaphore, #tpu.memory_space<semaphore_mem>>
    %3 = tpu.memref_squeeze %2 : memref<1x!tpu.dma_semaphore, #tpu.memory_space<semaphore_mem>> -> memref<!tpu.dma_semaphore, #tpu.memory_space<semaphore_mem>>
    tpu.enqueue_dma source(%arg3 : memref<512x768xbf16, #tpu.memory_space<any>>) target(%arg7 : memref<512x768xbf16, #tpu.memory_space<vmem>>) target_semaphore(%3 : memref<!tpu.dma_semaphore, #tpu.memory_space<semaphore_mem>>)
    %c0 = arith.constant 0 : index
    %c0_0 = arith.constant 0 : index
    %4 = vector.load %arg4[%c0, %c0_0] : memref<2x1536xf32, #tpu.memory_space<vmem>>, vector<1x256xf32>
    %c1 = arith.constant 1 : index
    %c0_1 = arith.constant 0 : index
    %5 = vector.load %arg4[%c1, %c0_1] : memref<2x1536xf32, #tpu.memory_space<vmem>>, vector<1x256xf32>
    %c0_2 = arith.constant 0 : index
    %c256 = arith.constant 256 : index
    %6 = vector.load %arg4[%c0_2, %c256] : memref<2x1536xf32, #tpu.memory_space<vmem>>, vector<1x512xf32>
    %c1_3 = arith.constant 1 : index
    %c256_4 = arith.constant 256 : index
    %7 = vector.load %arg4[%c1_3, %c256_4] : memref<2x1536xf32, #tpu.memory_space<vmem>>, vector<1x512xf32>
    %c0_5 = arith.constant 0 : index
    %c768 = arith.constant 768 : index
    %8 = vector.load %arg4[%c0_5, %c768] : memref<2x1536xf32, #tpu.memory_space<vmem>>, vector<1x768xf32>
    %c1_6 = arith.constant 1 : index
    %c768_7 = arith.constant 768 : index
    %9 = vector.load %arg4[%c1_6, %c768_7] : memref<2x1536xf32, #tpu.memory_space<vmem>>, vector<1x768xf32>
    %cst = arith.constant 0.000000e+00 : f32
    %10 = vector.broadcast %cst : f32 to vector<16x64xf32>
    %c0_8 = arith.constant 0 : index
    %c0_9 = arith.constant 0 : index
    %11 = vector.load %arg8[%c0_8, %c0_9] : memref<16x64xf32, #tpu.memory_space<vmem>>, vector<16x64xf32>
    tpu.vector_store %arg8[%c0_8, %c0_9], %10 {strides = array<i32>} : memref<16x64xf32, #tpu.memory_space<vmem>>, vector<16x64xf32>,
    %c0_10 = arith.constant 0 : index
    %c0_11 = arith.constant 0 : index
    %12 = vector.load %arg0[%c0_10, %c0_11] : memref<16x50xf32, #tpu.memory_space<vmem>>, vector<16x50xf32>
    %c0_12 = arith.constant 0 : index
    %c0_13 = arith.constant 0 : index
    %13 = vector.load %arg8[%c0_12, %c0_13] : memref<16x64xf32, #tpu.memory_space<vmem>>, vector<16x50xf32>
    tpu.vector_store %arg8[%c0_12, %c0_13], %12 {strides = array<i32>} : memref<16x64xf32, #tpu.memory_space<vmem>>, vector<16x50xf32>,
    %c0_14 = arith.constant 0 : index
    %c0_15 = arith.constant 0 : index
    %14 = vector.load %arg8[%c0_14, %c0_15] : memref<16x64xf32, #tpu.memory_space<vmem>>, vector<16x64xf32>
    %15 = arith.truncf %14 : vector<16x64xf32> to vector<16x64xbf16>
    %c0_16 = arith.constant 0 : index
    %c0_17 = arith.constant 0 : index
    %16 = vector.load %arg1[%c0_16, %c0_17] : memref<64x256xbf16, #tpu.memory_space<vmem>>, vector<64x256xbf16>
    %cst_18 = arith.constant dense<0.000000e+00> : vector<16x256xf32>
    %17 = tpu.matmul %15, %16, %cst_18 {dimension_numbers = #tpu.dot_dimension_numbers<[1], [0], [0], [1], [0, 0, 1, 1], [], []>} : vector<16x64xbf16>, vector<64x256xbf16>, vector<16x256xf32> -> vector<16x256xf32>
    %cst_19 = arith.constant dense<0.000000e+00> : vector<256xf32>
    %18 = vector.multi_reduction <add>, %17, %cst_19 [0] : vector<16x256xf32> to vector<256xf32>
    %19 = vector.shape_cast %18 : vector<256xf32> to vector<1x256xf32>
    %cst_20 = arith.constant 1.600000e+01 : f32
    %20 = vector.broadcast %cst_20 : f32 to vector<1x256xf32>
    %21 = arith.divf %19, %20 : vector<1x256xf32>
    %22 = vector.broadcast %21 : vector<1x256xf32> to vector<16x256xf32>
    %23 = arith.subf %17, %22 : vector<16x256xf32>
    %24 = arith.mulf %23, %23 : vector<16x256xf32>
    %cst_21 = arith.constant dense<0.000000e+00> : vector<256xf32>
    %25 = vector.multi_reduction <add>, %24, %cst_21 [0] : vector<16x256xf32> to vector<256xf32>
    %26 = vector.shape_cast %25 : vector<256xf32> to vector<1x256xf32>
    %cst_22 = arith.constant 1.600000e+01 : f32
    %27 = vector.broadcast %cst_22 : f32 to vector<1x256xf32>
    %28 = arith.divf %26, %27 : vector<1x256xf32>
    %cst_23 = arith.constant 9.99999974E-6 : f32
    %29 = vector.broadcast %cst_23 : f32 to vector<1x256xf32>
    %30 = arith.addf %28, %29 : vector<1x256xf32>
    %31 = math.rsqrt %30 : vector<1x256xf32>
    %32 = arith.mulf %31, %4 : vector<1x256xf32>
    %33 = vector.broadcast %21 : vector<1x256xf32> to vector<16x256xf32>
    %34 = arith.subf %17, %33 : vector<16x256xf32>
    %35 = vector.broadcast %32 : vector<1x256xf32> to vector<16x256xf32>
    %36 = arith.mulf %34, %35 : vector<16x256xf32>
    %37 = vector.broadcast %5 : vector<1x256xf32> to vector<16x256xf32>
    %38 = arith.addf %36, %37 : vector<16x256xf32>
    %cst_24 = arith.constant 0.000000e+00 : f32
    %39 = vector.broadcast %cst_24 : f32 to vector<16x256xf32>
    %40 = arith.maximumf %38, %39 : vector<16x256xf32>
    %c0_i32_25 = arith.constant 0 : i32
    %41 = tpu.memref_slice %arg9[%c0_i32_25] : memref<2x!tpu.dma_semaphore, #tpu.memory_space<semaphore_mem>> -> memref<1x!tpu.dma_semaphore, #tpu.memory_space<semaphore_mem>>
    %42 = tpu.memref_squeeze %41 : memref<1x!tpu.dma_semaphore, #tpu.memory_space<semaphore_mem>> -> memref<!tpu.dma_semaphore, #tpu.memory_space<semaphore_mem>>
    tpu.wait_dma2 semaphore(%42 : memref<!tpu.dma_semaphore, #tpu.memory_space<semaphore_mem>>) src(%arg2 : memref<256x512xbf16, #tpu.memory_space<any>>) dst(%arg6 : memref<256x512xbf16, #tpu.memory_space<vmem>>)
    %43 = arith.truncf %40 : vector<16x256xf32> to vector<16x256xbf16>
    %c0_26 = arith.constant 0 : index
    %c0_27 = arith.constant 0 : index
    %44 = vector.load %arg6[%c0_26, %c0_27] : memref<256x512xbf16, #tpu.memory_space<vmem>>, vector<256x512xbf16>
    %cst_28 = arith.constant dense<0.000000e+00> : vector<16x512xf32>
    %45 = tpu.matmul %43, %44, %cst_28 {dimension_numbers = #tpu.dot_dimension_numbers<[1], [0], [0], [1], [0, 0, 1, 1], [], []>} : vector<16x256xbf16>, vector<256x512xbf16>, vector<16x512xf32> -> vector<16x512xf32>
    %cst_29 = arith.constant dense<0.000000e+00> : vector<512xf32>
    %46 = vector.multi_reduction <add>, %45, %cst_29 [0] : vector<16x512xf32> to vector<512xf32>
    %47 = vector.shape_cast %46 : vector<512xf32> to vector<1x512xf32>
    %cst_30 = arith.constant 1.600000e+01 : f32
    %48 = vector.broadcast %cst_30 : f32 to vector<1x512xf32>
    %49 = arith.divf %47, %48 : vector<1x512xf32>
    %50 = vector.broadcast %49 : vector<1x512xf32> to vector<16x512xf32>
    %51 = arith.subf %45, %50 : vector<16x512xf32>
    %52 = arith.mulf %51, %51 : vector<16x512xf32>
    %cst_31 = arith.constant dense<0.000000e+00> : vector<512xf32>
    %53 = vector.multi_reduction <add>, %52, %cst_31 [0] : vector<16x512xf32> to vector<512xf32>
    %54 = vector.shape_cast %53 : vector<512xf32> to vector<1x512xf32>
    %cst_32 = arith.constant 1.600000e+01 : f32
    %55 = vector.broadcast %cst_32 : f32 to vector<1x512xf32>
    %56 = arith.divf %54, %55 : vector<1x512xf32>
    %cst_33 = arith.constant 9.99999974E-6 : f32
    %57 = vector.broadcast %cst_33 : f32 to vector<1x512xf32>
    %58 = arith.addf %56, %57 : vector<1x512xf32>
    %59 = math.rsqrt %58 : vector<1x512xf32>
    %60 = arith.mulf %59, %6 : vector<1x512xf32>
    %61 = vector.broadcast %49 : vector<1x512xf32> to vector<16x512xf32>
    %62 = arith.subf %45, %61 : vector<16x512xf32>
    %63 = vector.broadcast %60 : vector<1x512xf32> to vector<16x512xf32>
    %64 = arith.mulf %62, %63 : vector<16x512xf32>
    %65 = vector.broadcast %7 : vector<1x512xf32> to vector<16x512xf32>
    %66 = arith.addf %64, %65 : vector<16x512xf32>
    %cst_34 = arith.constant 0.000000e+00 : f32
    %67 = vector.broadcast %cst_34 : f32 to vector<16x512xf32>
    %68 = arith.maximumf %66, %67 : vector<16x512xf32>
    %c1_i32_35 = arith.constant 1 : i32
    %69 = tpu.memref_slice %arg9[%c1_i32_35] : memref<2x!tpu.dma_semaphore, #tpu.memory_space<semaphore_mem>> -> memref<1x!tpu.dma_semaphore, #tpu.memory_space<semaphore_mem>>
    %70 = tpu.memref_squeeze %69 : memref<1x!tpu.dma_semaphore, #tpu.memory_space<semaphore_mem>> -> memref<!tpu.dma_semaphore, #tpu.memory_space<semaphore_mem>>
    tpu.wait_dma2 semaphore(%70 : memref<!tpu.dma_semaphore, #tpu.memory_space<semaphore_mem>>) src(%arg3 : memref<512x768xbf16, #tpu.memory_space<any>>) dst(%arg7 : memref<512x768xbf16, #tpu.memory_space<vmem>>)
    %71 = arith.truncf %68 : vector<16x512xf32> to vector<16x512xbf16>
    %c0_36 = arith.constant 0 : index
    %c0_37 = arith.constant 0 : index
    %72 = vector.load %arg7[%c0_36, %c0_37] : memref<512x768xbf16, #tpu.memory_space<vmem>>, vector<512x768xbf16>
    %cst_38 = arith.constant dense<0.000000e+00> : vector<16x768xf32>
    %73 = tpu.matmul %71, %72, %cst_38 {dimension_numbers = #tpu.dot_dimension_numbers<[1], [0], [0], [1], [0, 0, 1, 1], [], []>} : vector<16x512xbf16>, vector<512x768xbf16>, vector<16x768xf32> -> vector<16x768xf32>
    %cst_39 = arith.constant dense<0.000000e+00> : vector<768xf32>
    %74 = vector.multi_reduction <add>, %73, %cst_39 [0] : vector<16x768xf32> to vector<768xf32>
    %75 = vector.shape_cast %74 : vector<768xf32> to vector<1x768xf32>
    %cst_40 = arith.constant 1.600000e+01 : f32
    %76 = vector.broadcast %cst_40 : f32 to vector<1x768xf32>
    %77 = arith.divf %75, %76 : vector<1x768xf32>
    %78 = vector.broadcast %77 : vector<1x768xf32> to vector<16x768xf32>
    %79 = arith.subf %73, %78 : vector<16x768xf32>
    %80 = arith.mulf %79, %79 : vector<16x768xf32>
    %cst_41 = arith.constant dense<0.000000e+00> : vector<768xf32>
    %81 = vector.multi_reduction <add>, %80, %cst_41 [0] : vector<16x768xf32> to vector<768xf32>
    %82 = vector.shape_cast %81 : vector<768xf32> to vector<1x768xf32>
    %cst_42 = arith.constant 1.600000e+01 : f32
    %83 = vector.broadcast %cst_42 : f32 to vector<1x768xf32>
    %84 = arith.divf %82, %83 : vector<1x768xf32>
    %cst_43 = arith.constant 9.99999974E-6 : f32
    %85 = vector.broadcast %cst_43 : f32 to vector<1x768xf32>
    %86 = arith.addf %84, %85 : vector<1x768xf32>
    %87 = math.rsqrt %86 : vector<1x768xf32>
    %88 = arith.mulf %87, %8 : vector<1x768xf32>
    %89 = vector.broadcast %77 : vector<1x768xf32> to vector<16x768xf32>
    %90 = arith.subf %73, %89 : vector<16x768xf32>
    %91 = vector.broadcast %88 : vector<1x768xf32> to vector<16x768xf32>
    %92 = arith.mulf %90, %91 : vector<16x768xf32>
    %93 = vector.broadcast %9 : vector<1x768xf32> to vector<16x768xf32>
    %94 = arith.addf %92, %93 : vector<16x768xf32>
    %95 = math.tanh %94 : vector<16x768xf32>
    %96 = arith.truncf %95 : vector<16x768xf32> to vector<16x768xbf16>
    %c0_44 = arith.constant 0 : index
    %c0_45 = arith.constant 0 : index
    %97 = vector.load %arg5[%c0_44, %c0_45] : memref<16x768xbf16, #tpu.memory_space<vmem>>, vector<16x768xbf16>
    tpu.vector_store %arg5[%c0_44, %c0_45], %96 {strides = array<i32>} : memref<16x768xbf16, #tpu.memory_space<vmem>>, vector<16x768xbf16>,
    return
  }
}

</mosaic_0001>

<llo_original>
// kernel: tpu_custom_call.1
$region0: #{tpu_custom_call.1}
  #allocation0 [shape = 'u32[]', space=smem, size = 0x4, offset = 0x4, fixed_abs, tag = 'smem constant byte address 0x4 - core index']
  #allocation1 [shape = 'u32[144,128]{1,0:T(1,128)}', space=vmem, size = 0x12000, scoped, tag = 'internal scratch']
  #allocation2 [shape = 'bf16[256,512]{1,0:T(8,128)(2,1)}', space=vmem, size = 0x40000, scoped, tag = 'scratch operand']
  #allocation3 [shape = 'bf16[512,768]{1,0:T(8,128)(2,1)}', space=vmem, size = 0xc0000, scoped, tag = 'scratch operand']
  #allocation4 [shape = 'f32[16,64]{1,0:T(8,128)}', space=vmem, size = 0x2000, scoped, tag = 'scratch operand']
  #allocation5 [shape = 's32[2]{0}', space=sflag, size = 0x8, scoped, tag = 'scratch operand']
  #allocation13 [shape = 's32[]', space=sflag, size = 0x4, offset = 0, fixed_abs, tag = 'sflag constant byte address 0x0 - dummy sync flag']
  #allocation14 [shape = 's32[]', space=sflag, size = 0x4, offset = 0, fixed_abs, tag = 'sflag constant byte address 0x0 - dummy sync flag']
  #allocation15 [shape = 'u32[]', space=smem, size = 0x4, offset = 0x44, fixed_abs, tag = 'smem constant byte address 0x44 - assertion arg 0']
  #allocation16 [shape = 'u32[]', space=smem, size = 0x4, offset = 0x48, fixed_abs, tag = 'smem constant byte address 0x48 - assertion arg 1']
  #allocation17 [shape = 's32[]', space=sflag, size = 0x4, offset = 0, fixed_abs, tag = 'sflag constant byte address 0x0 - dummy sync flag']
  #allocation18 [shape = 's32[]', space=sflag, size = 0x4, offset = 0, fixed_abs, tag = 'sflag constant byte address 0x0 - dummy sync flag']
  %s0 = inlined_call_operand.hbm [shape: f32[16,50], index: 0, kind: input, shape index: {}]
  %s1 = inlined_call_operand.hbm [shape: bf16[64,256], index: 1, kind: input, shape index: {}]
  %s2 = inlined_call_operand.hbm [shape: bf16[256,512], index: 2, kind: input, shape index: {}]
  %s3 = inlined_call_operand.hbm [shape: bf16[512,768], index: 3, kind: input, shape index: {}]
  %s4 = inlined_call_operand.hbm [shape: f32[2,1536], index: 4, kind: input, shape index: {}]
  %s5 = inlined_call_operand.hbm [shape: bf16[16,768], index: 5, kind: output, shape index: {}]
  %s6 = sld [smem:[#allocation0]]
  $region42: #{tpu_custom_call.1} parent=0
    _
  %s8 = ssub.s32 1, %s6
  %s9 = scalar_select 0, %s8, %s6
  $region1: #{tpu_custom_call.1} parent=0
    #allocation6 [shape = 'u8[8192]{0}', space=vmem, size = 0x2000, scoped, tag = 'input window, operand 0, single buffered']
    #allocation7 [shape = 's32[1]{0}', space=sflag, size = 0x4, scoped, tag = 'scoped memory for tpu_custom_call.1']
    #allocation8 [shape = 's32[1]{0}', space=sflag, size = 0x4, scoped, tag = 'scoped memory for tpu_custom_call.1']
    #allocation9 [shape = 'u8[32768]{0}', space=vmem, size = 0x8000, scoped, tag = 'input window, operand 1, single buffered']
    #allocation10 [shape = 's32[1]{0}', space=sflag, size = 0x4, scoped, tag = 'scoped memory for tpu_custom_call.1']
    #allocation11 [shape = 'u8[12288]{0}', space=vmem, size = 0x3000, scoped, tag = 'input window, operand 4, single buffered']
    #allocation12 [shape = 'u8[24576]{0}', space=vmem, size = 0x6000, scoped, tag = 'output window, operand 0, single buffered']
    %10 = vsyncpa [#allocation7], 0
    %11 = vsyncpa [#allocation10], 0
    %12 = vsyncpa [#allocation8], 0
    // Predicated region
    $region2: #{tpu_custom_call.1} parent=1 // pred_check
      _
    $region3: #{tpu_custom_call.1} parent=1 // pred_check_branch
      %14 = sbr.rel (0) target = $region5
    $region4: #{tpu_custom_call.1} parent=1 // pred_region
      %s16 = ssub.s32 256, 256
      %17 = vsyncadd [#allocation7], %s16
      %s18 = sshll.u32 [#allocation6], 4
      %s19 = int_to_ptr.vmem [resolvable:$true] %s18
      %24 = dma.hbm_to_vmem [thread:$0]  %s0, 256, %s19, [#allocation7], 128, 128, 8
    $region5: #{tpu_custom_call.1} parent=1 // pred_fallthru
      _
    // Predicated region
    $region6: #{tpu_custom_call.1} parent=1 // pred_check
      _
    $region7: #{tpu_custom_call.1} parent=1 // pred_check_branch
      %26 = sbr.rel (0) target = $region9
    $region8: #{tpu_custom_call.1} parent=1 // pred_region
      %s28 = ssub.s32 1024, 1024
      %29 = vsyncadd [#allocation10], %s28
      %s30 = sshll.u32 [#allocation9], 4
      %s31 = int_to_ptr.vmem [resolvable:$true] %s30
      %36 = dma.hbm_to_vmem [thread:$0]  %s1, 1024, %s31, [#allocation10], 128, 128, 8
    $region9: #{tpu_custom_call.1} parent=1 // pred_fallthru
      _
    // Predicated region
    $region10: #{tpu_custom_call.1} parent=1 // pred_check
      _
    $region11: #{tpu_custom_call.1} parent=1 // pred_check_branch
      %38 = sbr.rel (0) target = $region13
    $region12: #{tpu_custom_call.1} parent=1 // pred_region
      %s40 = ssub.s32 384, 384
      %41 = vsyncadd [#allocation10], %s40
      %s43 = sshll.u32 [#allocation11], 4
      %s44 = int_to_ptr.vmem [resolvable:$true] %s43
      %46 = dma.hbm_to_vmem [thread:$0]  %s4, 384, %s44, [#allocation10]
    $region13: #{tpu_custom_call.1} parent=1 // pred_fallthru
      _
    // Predicated region
    $region14: #{tpu_custom_call.1} parent=1 // pred_check
      _
    $region15: #{tpu_custom_call.1} parent=1 // pred_check_branch
      %48 = sbr.rel (0) target = $region17
    $region16: #{tpu_custom_call.1} parent=1 // pred_region
      %49 = dma.done [#allocation7], 256
    $region17: #{tpu_custom_call.1} parent=1 // pred_fallthru
      _
    // Predicated region
    $region18: #{tpu_custom_call.1} parent=1 // pred_check
      _
    $region19: #{tpu_custom_call.1} parent=1 // pred_check_branch
      %51 = sbr.rel (0) target = $region21
    $region20: #{tpu_custom_call.1} parent=1 // pred_region
      %52 = dma.done [#allocation10], 1024
    $region21: #{tpu_custom_call.1} parent=1 // pred_fallthru
      _
    // Predicated region
    $region22: #{tpu_custom_call.1} parent=1 // pred_check
      _
    $region23: #{tpu_custom_call.1} parent=1 // pred_check_branch
      %54 = sbr.rel (0) target = $region25
    $region24: #{tpu_custom_call.1} parent=1 // pred_region
      %55 = dma.done [#allocation10], 384
    $region25: #{tpu_custom_call.1} parent=1 // pred_fallthru
      _
    // Predicated region
    $region26: #{tpu_custom_call.1} parent=1 // pred_check
      _
    $region27: #{tpu_custom_call.1} parent=1 // pred_check_branch
      %58 = sbr.rel target = $region29
    $region28: #{tpu_custom_call.1} parent=1 // pred_region
      %59 = sst [smem:[#allocation15]] [#allocation14]
      %60 = sst [smem:[#allocation16]] [#allocation13]
    $region29: #{tpu_custom_call.1} parent=1 // pred_fallthru
      _
    %62 = shalt.err (0)
    %s64 = sshll.u32 [#allocation2], 4
    %s65 = int_to_ptr.vmem [resolvable:$true] %s64
    %67 = dma.hbm_to_vmem [thread:$0]  %s2, 8192, %s65, [#allocation5]
    %s68 = scalar_lea.sflag [#allocation5], 1
    // Predicated region
    $region30: #{tpu_custom_call.1} parent=1 // pred_check
      _
    $region31: #{tpu_custom_call.1} parent=1 // pred_check_branch
      %70 = sbr.rel target = $region33
    $region32: #{tpu_custom_call.1} parent=1 // pred_region
      %71 = sst [smem:[#allocation15]] [#allocation18]
      %72 = sst [smem:[#allocation16]] [#allocation17]
    $region33: #{tpu_custom_call.1} parent=1 // pred_fallthru
      _
    %74 = shalt.err (0)
    %s76 = sshll.u32 [#allocation3], 4
    %s77 = int_to_ptr.vmem [resolvable:$true] %s76
    %79 = dma.hbm_to_vmem [thread:$0]  %s3, 24576, %s77, %s68
    %v80 = vld [vmem:[#allocation11] ss:$2 sm:$0x3]
    %s81 = scalar_lea.vmem [#allocation11], 1
    %v82 = vld [vmem:[%s81] ss:$2 sm:$0x3]
    %s83 = scalar_lea.vmem [#allocation11], 4
    %v84 = vld [vmem:[%s83] ss:$2 sm:$0xf]
    %s85 = scalar_lea.vmem [#allocation11], 5
    %v86 = vld [vmem:[%s85] ss:$2 sm:$0xf]
    %s87 = scalar_lea.vmem [#allocation11], 12
    %v88 = vld [vmem:[%s87] ss:$2 sm:$0x3f]
    %s89 = scalar_lea.vmem [#allocation11], 13
    %v90 = vld [vmem:[%s89] ss:$2 sm:$0x3f]
    %vm91 = vcmask 523264
    %92 = vst.msk [vmem:[#allocation4] sm:$0xff] %vm91, 0.0
    %93 = vst.msk [vmem:[#allocation4 + $0x8] sm:$0xff] %vm91, 0.0
    %v94 = vld [vmem:[#allocation6] sm:$0xff]
    %v95 = vld [vmem:[#allocation6 + $0x8] sm:$0xff]
    %vm96 = vcmask 408576
    %97 = vst.msk [vmem:[#allocation4] sm:$0xff] %vm96, %v94
    %98 = vst.msk [vmem:[#allocation4 + $0x8] sm:$0xff] %vm96, %v95
    %v99 = vld [vmem:[#allocation4] sm:$0xff]
    %v100 = vld [vmem:[#allocation4 + $0x8] sm:$0xff]
    %v101 = vpack.c.bf16 %v100, %v99
    %v102 = vld [vmem:[#allocation9] sm:$0xff]
    %v103 = vld [vmem:[#allocation9 + $0x8] sm:$0xff]
    %v104 = vld [vmem:[#allocation9 + $0x10] sm:$0xff]
    %v105 = vld [vmem:[#allocation9 + $0x18] sm:$0xff]
    %v106 = vld [vmem:[#allocation9 + $0x20] sm:$0xff]
    %v107 = vld [vmem:[#allocation9 + $0x28] sm:$0xff]
    %v108 = vld [vmem:[#allocation9 + $0x30] sm:$0xff]
    %v109 = vld [vmem:[#allocation9 + $0x38] sm:$0xff]
    %v118 = vunpack.c.l.b16 %v102
    %v119 = vunpack.c.h.b16 %v102
    %v120 = vunpack.c.l.b16 %v103
    %v121 = vunpack.c.h.b16 %v103
    %v122 = vunpack.c.l.b16 %v104
    %v123 = vunpack.c.h.b16 %v104
    %v124 = vunpack.c.l.b16 %v105
    %v125 = vunpack.c.h.b16 %v105
    %v126 = vunpack.c.l.b16 %v106
    %v127 = vunpack.c.h.b16 %v106
    %v128 = vunpack.c.l.b16 %v107
    %v129 = vunpack.c.h.b16 %v107
    %v130 = vunpack.c.l.b16 %v108
    %v131 = vunpack.c.h.b16 %v108
    %v132 = vunpack.c.l.b16 %v109
    %v133 = vunpack.c.h.b16 %v109
    %v134 = vpack.c.b16 %v120, %v118
    %v135 = vpack.c.b16 %v121, %v119
    %v136 = vpack.c.b16 %v124, %v122
    %v137 = vpack.c.b16 %v125, %v123
    %v138 = vpack.c.b16 %v128, %v126
    %v139 = vpack.c.b16 %v129, %v127
    %v140 = vpack.c.b16 %v132, %v130
    %v141 = vpack.c.b16 %v133, %v131
    %v151 = vsel %vm91, %v101, 0
    %153 = vmatprep.subr.bf16.mxu0 0
    %154 = vmatpush1.bf16.msra.mxu0 0
    %155 = vmatprep.subr.bf16.mxu0 0
    %156 = vmatpush1.bf16.msra.mxu0 0
    %157 = vmatprep.subr.bf16.mxu0 0
    %158 = vmatpush1.bf16.msra.mxu0 0
    %159 = vmatprep.subr.bf16.mxu0 0
    %160 = vmatpush1.bf16.msra.mxu0 0
    %161 = vmatprep.subr.bf16.mxu0 %v141
    %162 = vmatpush1.bf16.msra.mxu0 %v140
    %163 = vmatprep.subr.bf16.mxu0 %v139
    %164 = vmatpush1.bf16.msra.mxu0 %v138
    %165 = vmatprep.subr.bf16.mxu0 %v137
    %166 = vmatpush1.bf16.msra.mxu0 %v136
    %167 = vmatprep.subr.bf16.mxu0 %v135
    %168 = vmatpush1.bf16.msra.mxu0 %v134
    %169 = vmatprep.subr.bf16.mxu0 0
    %170 = vmatpush2.bf16.msra.mxu0 0
    %171 = vmatprep.subr.bf16.mxu0 0
    %172 = vmatpush2.bf16.msra.mxu0 0
    %173 = vmatprep.subr.bf16.mxu0 0
    %174 = vmatpush2.bf16.msra.mxu0 0
    %175 = vmatprep.subr.bf16.mxu0 0
    %176 = vmatpush2.bf16.msra.mxu0 0
    %177 = vmatprep.subr.bf16.mxu0 0
    %178 = vmatpush2.bf16.msra.mxu0 0
    %179 = vmatprep.subr.bf16.mxu0 0
    %180 = vmatpush2.bf16.msra.mxu0 0
    %181 = vmatprep.subr.bf16.mxu0 0
    %182 = vmatpush2.bf16.msra.mxu0 0
    %183 = vmatprep.subr.bf16.mxu0 0
    %184 = vmatpush2.bf16.msra.mxu0 0
    %185 = vmatprep.mubr.bf16.mxu0 0
    %186 = vmatmul.mubr.bf16.gmra.mxu0 %v151
    %v187 = vpop.f32.mrf.mxu0
    %v188 = vadd.f32 0.0, %v187
    %v189 = vpop.f32.mrf.mxu0
    %v190 = vadd.f32 0.0, %v189
    %v191 = vpop.f32.mrf.mxu0
    %v192 = vadd.f32 0.0, %v191
    %v193 = vpop.f32.mrf.mxu0
    %v194 = vadd.f32 0.0, %v193
    %195 = vdwg.mxu0
    %v196 = vadd.f32 %v188, %v192
    %v197 = vrot.slane %v196, 4
    %v198 = vadd.f32 %v196, %v197
    %v199 = vrot.slane %v198, 2
    %v200 = vadd.f32 %v198, %v199
    %v201 = vrot.slane %v200, 1
    %v202 = vadd.f32 %v200, %v201
    %v203 = vadd.f32 %v190, %v194
    %v204 = vrot.slane %v203, 4
    %v205 = vadd.f32 %v203, %v204
    %v206 = vrot.slane %v205, 2
    %v207 = vadd.f32 %v205, %v206
    %v208 = vrot.slane %v207, 1
    %v209 = vadd.f32 %v207, %v208
    %v210 = vrcp.pop 16.0
    %v211 = vmul.f32 %v202, %v210
    %v212 = vmul.f32 %v209, %v210
    %v213 = vsub.f32 %v188, %v211
    %v214 = vsub.f32 %v190, %v212
    %v215 = vsub.f32 %v192, %v211
    %v216 = vsub.f32 %v194, %v212
    %v217 = vmul.f32 %v213, %v213
    %v218 = vmul.f32 %v214, %v214
    %v219 = vmul.f32 %v215, %v215
    %v220 = vmul.f32 %v216, %v216
    %v221 = vadd.f32 %v217, %v219
    %v222 = vrot.slane %v221, 4
    %v223 = vadd.f32 %v221, %v222
    %v224 = vrot.slane %v223, 2
    %v225 = vadd.f32 %v223, %v224
    %v226 = vrot.slane %v225, 1
    %v227 = vadd.f32 %v225, %v226
    %v228 = vadd.f32 %v218, %v220
    %v229 = vrot.slane %v228, 4
    %v230 = vadd.f32 %v228, %v229
    %v231 = vrot.slane %v230, 2
    %v232 = vadd.f32 %v230, %v231
    %v233 = vrot.slane %v232, 1
    %v234 = vadd.f32 %v232, %v233
    %v235 = vmul.f32 %v227, %v210
    %v236 = vmul.f32 %v234, %v210
    %v237 = vadd.f32 %v235, 1e-05
    %v238 = vadd.f32 %v236, 1e-05
    %v239 = vrsqrt.pop %v237
    %v240 = vrsqrt.pop %v238
    %v242 = vlaneseq
    %v243 = vshrl.u32 %v242, 7
    %v244 = vsub.s32 0, %v243
    %v245 = vrot.slane %v80, %v244
    %v246 = vlaneseq
    %v247 = vshrl.u32 %v246, 7
    %v248 = vsub.s32 1, %v247
    %v249 = vrot.slane %v80, %v248
    %v252 = vmul.f32 %v239, %v245
    %v253 = vmul.f32 %v240, %v249
    %v254 = vlaneseq
    %v255 = vshrl.u32 %v254, 7
    %v256 = vsub.s32 0, %v255
    %v257 = vrot.slane %v252, %v256
    %v258 = vlaneseq
    %v259 = vshrl.u32 %v258, 7
    %v260 = vsub.s32 0, %v259
    %v261 = vrot.slane %v253, %v260
    %v262 = vmul.f32 %v213, %v257
    %v263 = vmul.f32 %v214, %v261
    %v264 = vmul.f32 %v215, %v257
    %v265 = vmul.f32 %v216, %v261
    %v267 = vlaneseq
    %v268 = vshrl.u32 %v267, 7
    %v269 = vsub.s32 0, %v268
    %v270 = vrot.slane %v82, %v269
    %v271 = vlaneseq
    %v272 = vshrl.u32 %v271, 7
    %v273 = vsub.s32 1, %v272
    %v274 = vrot.slane %v82, %v273
    %v277 = vadd.f32 %v262, %v270
    %v278 = vadd.f32 %v263, %v274
    %v279 = vadd.f32 %v264, %v270
    %v280 = vadd.f32 %v265, %v274
    %v281 = vmax.f32 %v277, 0.0
    %v282 = vmax.f32 %v278, 0.0
    %v283 = vmax.f32 %v279, 0.0
    %v284 = vmax.f32 %v280, 0.0
    %s285 = smul.u32 4, 32
    %s286 = smul.u32 %s285, 4
    %s287 = sshll.u32 %s286, 4
    %288 = dma.done [#allocation5], %s287
    %v289 = vpack.c.bf16 %v283, %v281
    %v290 = vpack.c.bf16 %v284, %v282
    %v291 = vld [vmem:[#allocation2] sm:$0xff]
    %v292 = vld [vmem:[#allocation2 + $0x8] sm:$0xff]
    %v293 = vld [vmem:[#allocation2 + $0x10] sm:$0xff]
    %v294 = vld [vmem:[#allocation2 + $0x18] sm:$0xff]
    %v295 = vld [vmem:[#allocation2 + $0x20] sm:$0xff]
    %v296 = vld [vmem:[#allocation2 + $0x28] sm:$0xff]
    %v297 = vld [vmem:[#allocation2 + $0x30] sm:$0xff]
    %v298 = vld [vmem:[#allocation2 + $0x38] sm:$0xff]
    %v299 = vld [vmem:[#allocation2 + $0x40] sm:$0xff]
    %v300 = vld [vmem:[#allocation2 + $0x48] sm:$0xff]
    %v301 = vld [vmem:[#allocation2 + $0x50] sm:$0xff]
    %v302 = vld [vmem:[#allocation2 + $0x58] sm:$0xff]
    %v303 = vld [vmem:[#allocation2 + $0x60] sm:$0xff]
    %v304 = vld [vmem:[#allocation2 + $0x68] sm:$0xff]
    %v305 = vld [vmem:[#allocation2 + $0x70] sm:$0xff]
    %v306 = vld [vmem:[#allocation2 + $0x78] sm:$0xff]
    %v307 = vld [vmem:[#allocation2 + $0x80] sm:$0xff]
    %v308 = vld [vmem:[#allocation2 + $0x88] sm:$0xff]
    %v309 = vld [vmem:[#allocation2 + $0x90] sm:$0xff]
    %v310 = vld [vmem:[#allocation2 + $0x98] sm:$0xff]
    %v311 = vld [vmem:[#allocation2 + $0xa0] sm:$0xff]
    %v312 = vld [vmem:[#allocation2 + $0xa8] sm:$0xff]
    %v313 = vld [vmem:[#allocation2 + $0xb0] sm:$0xff]
    %v314 = vld [vmem:[#allocation2 + $0xb8] sm:$0xff]
    %v315 = vld [vmem:[#allocation2 + $0xc0] sm:$0xff]
    %v316 = vld [vmem:[#allocation2 + $0xc8] sm:$0xff]
    %v317 = vld [vmem:[#allocation2 + $0xd0] sm:$0xff]
    %v318 = vld [vmem:[#allocation2 + $0xd8] sm:$0xff]
    %v319 = vld [vmem:[#allocation2 + $0xe0] sm:$0xff]
    %v320 = vld [vmem:[#allocation2 + $0xe8] sm:$0xff]
    %v321 = vld [vmem:[#allocation2 + $0xf0] sm:$0xff]
    %v322 = vld [vmem:[#allocation2 + $0xf8] sm:$0xff]
    %v323 = vld [vmem:[#allocation2 + $0x100] sm:$0xff]
    %v324 = vld [vmem:[#allocation2 + $0x108] sm:$0xff]
    %v325 = vld [vmem:[#allocation2 + $0x110] sm:$0xff]
    %v326 = vld [vmem:[#allocation2 + $0x118] sm:$0xff]
    %v327 = vld [vmem:[#allocation2 + $0x120] sm:$0xff]
    %v328 = vld [vmem:[#allocation2 + $0x128] sm:$0xff]
    %v329 = vld [vmem:[#allocation2 + $0x130] sm:$0xff]
    %v330 = vld [vmem:[#allocation2 + $0x138] sm:$0xff]
    %v331 = vld [vmem:[#allocation2 + $0x140] sm:$0xff]
    %v332 = vld [vmem:[#allocation2 + $0x148] sm:$0xff]
    %v333 = vld [vmem:[#allocation2 + $0x150] sm:$0xff]
    %v334 = vld [vmem:[#allocation2 + $0x158] sm:$0xff]
    %v335 = vld [vmem:[#allocation2 + $0x160] sm:$0xff]
    %v336 = vld [vmem:[#allocation2 + $0x168] sm:$0xff]
    %v337 = vld [vmem:[#allocation2 + $0x170] sm:$0xff]
    %v338 = vld [vmem:[#allocation2 + $0x178] sm:$0xff]
    %v339 = vld [vmem:[#allocation2 + $0x180] sm:$0xff]
    %v340 = vld [vmem:[#allocation2 + $0x188] sm:$0xff]
    %v341 = vld [vmem:[#allocation2 + $0x190] sm:$0xff]
    %v342 = vld [vmem:[#allocation2 + $0x198] sm:$0xff]
    %v343 = vld [vmem:[#allocation2 + $0x1a0] sm:$0xff]
    %v344 = vld [vmem:[#allocation2 + $0x1a8] sm:$0xff]
    %v345 = vld [vmem:[#allocation2 + $0x1b0] sm:$0xff]
    %v346 = vld [vmem:[#allocation2 + $0x1b8] sm:$0xff]
    %v347 = vld [vmem:[#allocation2 + $0x1c0] sm:$0xff]
    %v348 = vld [vmem:[#allocation2 + $0x1c8] sm:$0xff]
    %v349 = vld [vmem:[#allocation2 + $0x1d0] sm:$0xff]
    %v350 = vld [vmem:[#allocation2 + $0x1d8] sm:$0xff]
    %v351 = vld [vmem:[#allocation2 + $0x1e0] sm:$0xff]
    %v352 = vld [vmem:[#allocation2 + $0x1e8] sm:$0xff]
    %v353 = vld [vmem:[#allocation2 + $0x1f0] sm:$0xff]
    %v354 = vld [vmem:[#allocation2 + $0x1f8] sm:$0xff]
    %v419 = vunpack.c.l.b16 %v291
    %v420 = vunpack.c.h.b16 %v291
    %v421 = vunpack.c.l.b16 %v292
    %v422 = vunpack.c.h.b16 %v292
    %v423 = vunpack.c.l.b16 %v293
    %v424 = vunpack.c.h.b16 %v293
    %v425 = vunpack.c.l.b16 %v294
    %v426 = vunpack.c.h.b16 %v294
    %v427 = vunpack.c.l.b16 %v295
    %v428 = vunpack.c.h.b16 %v295
    %v429 = vunpack.c.l.b16 %v296
    %v430 = vunpack.c.h.b16 %v296
    %v431 = vunpack.c.l.b16 %v297
    %v432 = vunpack.c.h.b16 %v297
    %v433 = vunpack.c.l.b16 %v298
    %v434 = vunpack.c.h.b16 %v298
    %v435 = vunpack.c.l.b16 %v299
    %v436 = vunpack.c.h.b16 %v299
    %v437 = vunpack.c.l.b16 %v300
    %v438 = vunpack.c.h.b16 %v300
    %v439 = vunpack.c.l.b16 %v301
    %v440 = vunpack.c.h.b16 %v301
    %v441 = vunpack.c.l.b16 %v302
    %v442 = vunpack.c.h.b16 %v302
    %v443 = vunpack.c.l.b16 %v303
    %v444 = vunpack.c.h.b16 %v303
    %v445 = vunpack.c.l.b16 %v304
    %v446 = vunpack.c.h.b16 %v304
    %v447 = vunpack.c.l.b16 %v305
    %v448 = vunpack.c.h.b16 %v305
    %v449 = vunpack.c.l.b16 %v306
    %v450 = vunpack.c.h.b16 %v306
    %v451 = vunpack.c.l.b16 %v307
    %v452 = vunpack.c.h.b16 %v307
    %v453 = vunpack.c.l.b16 %v308
    %v454 = vunpack.c.h.b16 %v308
    %v455 = vunpack.c.l.b16 %v309
    %v456 = vunpack.c.h.b16 %v309
    %v457 = vunpack.c.l.b16 %v310
    %v458 = vunpack.c.h.b16 %v310
    %v459 = vunpack.c.l.b16 %v311
    %v460 = vunpack.c.h.b16 %v311
    %v461 = vunpack.c.l.b16 %v312
    %v462 = vunpack.c.h.b16 %v312
    %v463 = vunpack.c.l.b16 %v313
    %v464 = vunpack.c.h.b16 %v313
    %v465 = vunpack.c.l.b16 %v314
    %v466 = vunpack.c.h.b16 %v314
    %v467 = vunpack.c.l.b16 %v315
    %v468 = vunpack.c.h.b16 %v315
    %v469 = vunpack.c.l.b16 %v316
    %v470 = vunpack.c.h.b16 %v316
    %v471 = vunpack.c.l.b16 %v317
    %v472 = vunpack.c.h.b16 %v317
    %v473 = vunpack.c.l.b16 %v318
    %v474 = vunpack.c.h.b16 %v318
    %v475 = vunpack.c.l.b16 %v319
    %v476 = vunpack.c.h.b16 %v319
    %v477 = vunpack.c.l.b16 %v320
    %v478 = vunpack.c.h.b16 %v320
    %v479 = vunpack.c.l.b16 %v321
    %v480 = vunpack.c.h.b16 %v321
    %v481 = vunpack.c.l.b16 %v322
    %v482 = vunpack.c.h.b16 %v322
    %v483 = vunpack.c.l.b16 %v323
    %v484 = vunpack.c.h.b16 %v323
    %v485 = vunpack.c.l.b16 %v324
    %v486 = vunpack.c.h.b16 %v324
    %v487 = vunpack.c.l.b16 %v325
    %v488 = vunpack.c.h.b16 %v325
    %v489 = vunpack.c.l.b16 %v326
    %v490 = vunpack.c.h.b16 %v326
    %v491 = vunpack.c.l.b16 %v327
    %v492 = vunpack.c.h.b16 %v327
    %v493 = vunpack.c.l.b16 %v328
    %v494 = vunpack.c.h.b16 %v328
    %v495 = vunpack.c.l.b16 %v329
    %v496 = vunpack.c.h.b16 %v329
    %v497 = vunpack.c.l.b16 %v330
    %v498 = vunpack.c.h.b16 %v330
    %v499 = vunpack.c.l.b16 %v331
    %v500 = vunpack.c.h.b16 %v331
    %v501 = vunpack.c.l.b16 %v332
    %v502 = vunpack.c.h.b16 %v332
    %v503 = vunpack.c.l.b16 %v333
    %v504 = vunpack.c.h.b16 %v333
    %v505 = vunpack.c.l.b16 %v334
    %v506 = vunpack.c.h.b16 %v334
    %v507 = vunpack.c.l.b16 %v335
    %v508 = vunpack.c.h.b16 %v335
    %v509 = vunpack.c.l.b16 %v336
    %v510 = vunpack.c.h.b16 %v336
    %v511 = vunpack.c.l.b16 %v337
    %v512 = vunpack.c.h.b16 %v337
    %v513 = vunpack.c.l.b16 %v338
    %v514 = vunpack.c.h.b16 %v338
    %v515 = vunpack.c.l.b16 %v339
    %v516 = vunpack.c.h.b16 %v339
    %v517 = vunpack.c.l.b16 %v340
    %v518 = vunpack.c.h.b16 %v340
    %v519 = vunpack.c.l.b16 %v341
    %v520 = vunpack.c.h.b16 %v341
    %v521 = vunpack.c.l.b16 %v342
    %v522 = vunpack.c.h.b16 %v342
    %v523 = vunpack.c.l.b16 %v343
    %v524 = vunpack.c.h.b16 %v343
    %v525 = vunpack.c.l.b16 %v344
    %v526 = vunpack.c.h.b16 %v344
    %v527 = vunpack.c.l.b16 %v345
    %v528 = vunpack.c.h.b16 %v345
    %v529 = vunpack.c.l.b16 %v346
    %v530 = vunpack.c.h.b16 %v346
    %v531 = vunpack.c.l.b16 %v347
    %v532 = vunpack.c.h.b16 %v347
    %v533 = vunpack.c.l.b16 %v348
    %v534 = vunpack.c.h.b16 %v348
    %v535 = vunpack.c.l.b16 %v349
    %v536 = vunpack.c.h.b16 %v349
    %v537 = vunpack.c.l.b16 %v350
    %v538 = vunpack.c.h.b16 %v350
    %v539 = vunpack.c.l.b16 %v351
    %v540 = vunpack.c.h.b16 %v351
    %v541 = vunpack.c.l.b16 %v352
    %v542 = vunpack.c.h.b16 %v352
    %v543 = vunpack.c.l.b16 %v353
    %v544 = vunpack.c.h.b16 %v353
    %v545 = vunpack.c.l.b16 %v354
    %v546 = vunpack.c.h.b16 %v354
    %v547 = vpack.c.b16 %v423, %v419
    %v548 = vpack.c.b16 %v424, %v420
    %v549 = vpack.c.b16 %v425, %v421
    %v550 = vpack.c.b16 %v426, %v422
    %v551 = vpack.c.b16 %v431, %v427
    %v552 = vpack.c.b16 %v432, %v428
    %v553 = vpack.c.b16 %v433, %v429
    %v554 = vpack.c.b16 %v434, %v430
    %v555 = vpack.c.b16 %v439, %v435
    %v556 = vpack.c.b16 %v440, %v436
    %v557 = vpack.c.b16 %v441, %v437
    %v558 = vpack.c.b16 %v442, %v438
    %v559 = vpack.c.b16 %v447, %v443
    %v560 = vpack.c.b16 %v448, %v444
    %v561 = vpack.c.b16 %v449, %v445
    %v562 = vpack.c.b16 %v450, %v446
    %v563 = vpack.c.b16 %v455, %v451
    %v564 = vpack.c.b16 %v456, %v452
    %v565 = vpack.c.b16 %v457, %v453
    %v566 = vpack.c.b16 %v458, %v454
    %v567 = vpack.c.b16 %v463, %v459
    %v568 = vpack.c.b16 %v464, %v460
    %v569 = vpack.c.b16 %v465, %v461
    %v570 = vpack.c.b16 %v466, %v462
    %v571 = vpack.c.b16 %v471, %v467
    %v572 = vpack.c.b16 %v472, %v468
    %v573 = vpack.c.b16 %v473, %v469
    %v574 = vpack.c.b16 %v474, %v470
    %v575 = vpack.c.b16 %v479, %v475
    %v576 = vpack.c.b16 %v480, %v476
    %v577 = vpack.c.b16 %v481, %v477
    %v578 = vpack.c.b16 %v482, %v478
    %v579 = vpack.c.b16 %v487, %v483
    %v580 = vpack.c.b16 %v488, %v484
    %v581 = vpack.c.b16 %v489, %v485
    %v582 = vpack.c.b16 %v490, %v486
    %v583 = vpack.c.b16 %v495, %v491
    %v584 = vpack.c.b16 %v496, %v492
    %v585 = vpack.c.b16 %v497, %v493
    %v586 = vpack.c.b16 %v498, %v494
    %v587 = vpack.c.b16 %v503, %v499
    %v588 = vpack.c.b16 %v504, %v500
    %v589 = vpack.c.b16 %v505, %v501
    %v590 = vpack.c.b16 %v506, %v502
    %v591 = vpack.c.b16 %v511, %v507
    %v592 = vpack.c.b16 %v512, %v508
    %v593 = vpack.c.b16 %v513, %v509
    %v594 = vpack.c.b16 %v514, %v510
    %v595 = vpack.c.b16 %v519, %v515
    %v596 = vpack.c.b16 %v520, %v516
    %v597 = vpack.c.b16 %v521, %v517
    %v598 = vpack.c.b16 %v522, %v518
    %v599 = vpack.c.b16 %v527, %v523
    %v600 = vpack.c.b16 %v528, %v524
    %v601 = vpack.c.b16 %v529, %v525
    %v602 = vpack.c.b16 %v530, %v526
    %v603 = vpack.c.b16 %v535, %v531
    %v604 = vpack.c.b16 %v536, %v532
    %v605 = vpack.c.b16 %v537, %v533
    %v606 = vpack.c.b16 %v538, %v534
    %v607 = vpack.c.b16 %v543, %v539
    %v608 = vpack.c.b16 %v544, %v540
    %v609 = vpack.c.b16 %v545, %v541
    %v610 = vpack.c.b16 %v546, %v542
    %675 = vmatprep.subr.bf16.mxu0 %v576
    %676 = vmatpush1.bf16.msra.mxu0 %v575
    %677 = vmatprep.subr.bf16.mxu0 %v572
    %678 = vmatpush1.bf16.msra.mxu0 %v571
    %679 = vmatprep.subr.bf16.mxu0 %v568
    %680 = vmatpush1.bf16.msra.mxu0 %v567
    %681 = vmatprep.subr.bf16.mxu0 %v564
    %682 = vmatpush1.bf16.msra.mxu0 %v563
    %683 = vmatprep.subr.bf16.mxu0 %v560
    %684 = vmatpush1.bf16.msra.mxu0 %v559
    %685 = vmatprep.subr.bf16.mxu0 %v556
    %686 = vmatpush1.bf16.msra.mxu0 %v555
    %687 = vmatprep.subr.bf16.mxu0 %v552
    %688 = vmatpush1.bf16.msra.mxu0 %v551
    %689 = vmatprep.subr.bf16.mxu0 %v548
    %690 = vmatpush1.bf16.msra.mxu0 %v547
    %691 = vmatprep.subr.bf16.mxu0 %v608
    %692 = vmatpush2.bf16.msra.mxu0 %v607
    %693 = vmatprep.subr.bf16.mxu0 %v604
    %694 = vmatpush2.bf16.msra.mxu0 %v603
    %695 = vmatprep.subr.bf16.mxu0 %v600
    %696 = vmatpush2.bf16.msra.mxu0 %v599
    %697 = vmatprep.subr.bf16.mxu0 %v596
    %698 = vmatpush2.bf16.msra.mxu0 %v595
    %699 = vmatprep.subr.bf16.mxu0 %v592
    %700 = vmatpush2.bf16.msra.mxu0 %v591
    %701 = vmatprep.subr.bf16.mxu0 %v588
    %702 = vmatpush2.bf16.msra.mxu0 %v587
    %703 = vmatprep.subr.bf16.mxu0 %v584
    %704 = vmatpush2.bf16.msra.mxu0 %v583
    %705 = vmatprep.subr.bf16.mxu0 %v580
    %706 = vmatpush2.bf16.msra.mxu0 %v579
    %707 = vmatprep.mubr.bf16.mxu0 %v290
    %708 = vmatmul.mubr.bf16.gmra.mxu0 %v289
    %v709 = vpop.f32.mrf.mxu0
    %v710 = vadd.f32 0.0, %v709
    %v711 = vpop.f32.mrf.mxu0
    %v712 = vadd.f32 0.0, %v711
    %v713 = vpop.f32.mrf.mxu0
    %v714 = vadd.f32 0.0, %v713
    %v715 = vpop.f32.mrf.mxu0
    %v716 = vadd.f32 0.0, %v715
    %717 = vdwg.mxu0
    %718 = vmatprep.subr.bf16.mxu0 %v578
    %719 = vmatpush1.bf16.msra.mxu0 %v577
    %720 = vmatprep.subr.bf16.mxu0 %v574
    %721 = vmatpush1.bf16.msra.mxu0 %v573
    %722 = vmatprep.subr.bf16.mxu0 %v570
    %723 = vmatpush1.bf16.msra.mxu0 %v569
    %724 = vmatprep.subr.bf16.mxu0 %v566
    %725 = vmatpush1.bf16.msra.mxu0 %v565
    %726 = vmatprep.subr.bf16.mxu0 %v562
    %727 = vmatpush1.bf16.msra.mxu0 %v561
    %728 = vmatprep.subr.bf16.mxu0 %v558
    %729 = vmatpush1.bf16.msra.mxu0 %v557
    %730 = vmatprep.subr.bf16.mxu0 %v554
    %731 = vmatpush1.bf16.msra.mxu0 %v553
    %732 = vmatprep.subr.bf16.mxu0 %v550
    %733 = vmatpush1.bf16.msra.mxu0 %v549
    %734 = vmatprep.subr.bf16.mxu0 %v610
    %735 = vmatpush2.bf16.msra.mxu0 %v609
    %736 = vmatprep.subr.bf16.mxu0 %v606
    %737 = vmatpush2.bf16.msra.mxu0 %v605
    %738 = vmatprep.subr.bf16.mxu0 %v602
    %739 = vmatpush2.bf16.msra.mxu0 %v601
    %740 = vmatprep.subr.bf16.mxu0 %v598
    %741 = vmatpush2.bf16.msra.mxu0 %v597
    %742 = vmatprep.subr.bf16.mxu0 %v594
    %743 = vmatpush2.bf16.msra.mxu0 %v593
    %744 = vmatprep.subr.bf16.mxu0 %v590
    %745 = vmatpush2.bf16.msra.mxu0 %v589
    %746 = vmatprep.subr.bf16.mxu0 %v586
    %747 = vmatpush2.bf16.msra.mxu0 %v585
    %748 = vmatprep.subr.bf16.mxu0 %v582
    %749 = vmatpush2.bf16.msra.mxu0 %v581
    %750 = vmatprep.mubr.bf16.mxu0 %v290
    %751 = vmatmul.mubr.bf16.gmra.mxu0 %v289
    %v752 = vpop.f32.mrf.mxu0
    %v753 = vadd.f32 0.0, %v752
    %v754 = vpop.f32.mrf.mxu0
    %v755 = vadd.f32 0.0, %v754
    %v756 = vpop.f32.mrf.mxu0
    %v757 = vadd.f32 0.0, %v756
    %v758 = vpop.f32.mrf.mxu0
    %v759 = vadd.f32 0.0, %v758
    %760 = vdwg.mxu0
    %v761 = vadd.f32 %v710, %v714
    %v762 = vrot.slane %v761, 4
    %v763 = vadd.f32 %v761, %v762
    %v764 = vrot.slane %v763, 2
    %v765 = vadd.f32 %v763, %v764
    %v766 = vrot.slane %v765, 1
    %v767 = vadd.f32 %v765, %v766
    %v768 = vadd.f32 %v712, %v716
    %v769 = vrot.slane %v768, 4
    %v770 = vadd.f32 %v768, %v769
    %v771 = vrot.slane %v770, 2
    %v772 = vadd.f32 %v770, %v771
    %v773 = vrot.slane %v772, 1
    %v774 = vadd.f32 %v772, %v773
    %v775 = vadd.f32 %v753, %v757
    %v776 = vrot.slane %v775, 4
    %v777 = vadd.f32 %v775, %v776
    %v778 = vrot.slane %v777, 2
    %v779 = vadd.f32 %v777, %v778
    %v780 = vrot.slane %v779, 1
    %v781 = vadd.f32 %v779, %v780
    %v782 = vadd.f32 %v755, %v759
    %v783 = vrot.slane %v782, 4
    %v784 = vadd.f32 %v782, %v783
    %v785 = vrot.slane %v784, 2
    %v786 = vadd.f32 %v784, %v785
    %v787 = vrot.slane %v786, 1
    %v788 = vadd.f32 %v786, %v787
    %v789 = vmul.f32 %v767, %v210
    %v790 = vmul.f32 %v774, %v210
    %v791 = vmul.f32 %v781, %v210
    %v792 = vmul.f32 %v788, %v210
    %v793 = vsub.f32 %v710, %v789
    %v794 = vsub.f32 %v712, %v790
    %v795 = vsub.f32 %v753, %v791
    %v796 = vsub.f32 %v755, %v792
    %v797 = vsub.f32 %v714, %v789
    %v798 = vsub.f32 %v716, %v790
    %v799 = vsub.f32 %v757, %v791
    %v800 = vsub.f32 %v759, %v792
    %v801 = vmul.f32 %v793, %v793
    %v802 = vmul.f32 %v794, %v794
    %v803 = vmul.f32 %v795, %v795
    %v804 = vmul.f32 %v796, %v796
    %v805 = vmul.f32 %v797, %v797
    %v806 = vmul.f32 %v798, %v798
    %v807 = vmul.f32 %v799, %v799
    %v808 = vmul.f32 %v800, %v800
    %v809 = vadd.f32 %v801, %v805
    %v810 = vrot.slane %v809, 4
    %v811 = vadd.f32 %v809, %v810
    %v812 = vrot.slane %v811, 2
    %v813 = vadd.f32 %v811, %v812
    %v814 = vrot.slane %v813, 1
    %v815 = vadd.f32 %v813, %v814
    %v816 = vadd.f32 %v802, %v806
    %v817 = vrot.slane %v816, 4
    %v818 = vadd.f32 %v816, %v817
    %v819 = vrot.slane %v818, 2
    %v820 = vadd.f32 %v818, %v819
    %v821 = vrot.slane %v820, 1
    %v822 = vadd.f32 %v820, %v821
    %v823 = vadd.f32 %v803, %v807
    %v824 = vrot.slane %v823, 4
    %v825 = vadd.f32 %v823, %v824
    %v826 = vrot.slane %v825, 2
    %v827 = vadd.f32 %v825, %v826
    %v828 = vrot.slane %v827, 1
    %v829 = vadd.f32 %v827, %v828
    %v830 = vadd.f32 %v804, %v808
    %v831 = vrot.slane %v830, 4
    %v832 = vadd.f32 %v830, %v831
    %v833 = vrot.slane %v832, 2
    %v834 = vadd.f32 %v832, %v833
    %v835 = vrot.slane %v834, 1
    %v836 = vadd.f32 %v834, %v835
    %v837 = vmul.f32 %v815, %v210
    %v838 = vmul.f32 %v822, %v210
    %v839 = vmul.f32 %v829, %v210
    %v840 = vmul.f32 %v836, %v210
    %v841 = vadd.f32 %v837, 1e-05
    %v842 = vadd.f32 %v838, 1e-05
    %v843 = vadd.f32 %v839, 1e-05
    %v844 = vadd.f32 %v840, 1e-05
    %v845 = vrsqrt.pop %v841
    %v846 = vrsqrt.pop %v842
    %v847 = vrsqrt.pop %v843
    %v848 = vrsqrt.pop %v844
    %v850 = vlaneseq
    %v851 = vshrl.u32 %v850, 7
    %v852 = vsub.s32 0, %v851
    %v853 = vrot.slane %v84, %v852
    %v854 = vlaneseq
    %v855 = vshrl.u32 %v854, 7
    %v856 = vsub.s32 1, %v855
    %v857 = vrot.slane %v84, %v856
    %v858 = vlaneseq
    %v859 = vshrl.u32 %v858, 7
    %v860 = vsub.s32 2, %v859
    %v861 = vrot.slane %v84, %v860
    %v862 = vlaneseq
    %v863 = vshrl.u32 %v862, 7
    %v864 = vsub.s32 3, %v863
    %v865 = vrot.slane %v84, %v864
    %v870 = vmul.f32 %v845, %v853
    %v871 = vmul.f32 %v846, %v857
    %v872 = vmul.f32 %v847, %v861
    %v873 = vmul.f32 %v848, %v865
    %v874 = vlaneseq
    %v875 = vshrl.u32 %v874, 7
    %v876 = vsub.s32 0, %v875
    %v877 = vrot.slane %v870, %v876
    %v878 = vlaneseq
    %v879 = vshrl.u32 %v878, 7
    %v880 = vsub.s32 0, %v879
    %v881 = vrot.slane %v871, %v880
    %v882 = vlaneseq
    %v883 = vshrl.u32 %v882, 7
    %v884 = vsub.s32 0, %v883
    %v885 = vrot.slane %v872, %v884
    %v886 = vlaneseq
    %v887 = vshrl.u32 %v886, 7
    %v888 = vsub.s32 0, %v887
    %v889 = vrot.slane %v873, %v888
    %v890 = vmul.f32 %v793, %v877
    %v891 = vmul.f32 %v794, %v881
    %v892 = vmul.f32 %v795, %v885
    %v893 = vmul.f32 %v796, %v889
    %v894 = vmul.f32 %v797, %v877
    %v895 = vmul.f32 %v798, %v881
    %v896 = vmul.f32 %v799, %v885
    %v897 = vmul.f32 %v800, %v889
    %v899 = vlaneseq
    %v900 = vshrl.u32 %v899, 7
    %v901 = vsub.s32 0, %v900
    %v902 = vrot.slane %v86, %v901
    %v903 = vlaneseq
    %v904 = vshrl.u32 %v903, 7
    %v905 = vsub.s32 1, %v904
    %v906 = vrot.slane %v86, %v905
    %v907 = vlaneseq
    %v908 = vshrl.u32 %v907, 7
    %v909 = vsub.s32 2, %v908
    %v910 = vrot.slane %v86, %v909
    %v911 = vlaneseq
    %v912 = vshrl.u32 %v911, 7
    %v913 = vsub.s32 3, %v912
    %v914 = vrot.slane %v86, %v913
    %v919 = vadd.f32 %v890, %v902
    %v920 = vadd.f32 %v891, %v906
    %v921 = vadd.f32 %v892, %v910
    %v922 = vadd.f32 %v893, %v914
    %v923 = vadd.f32 %v894, %v902
    %v924 = vadd.f32 %v895, %v906
    %v925 = vadd.f32 %v896, %v910
    %v926 = vadd.f32 %v897, %v914
    %v927 = vmax.f32 %v919, 0.0
    %v928 = vmax.f32 %v920, 0.0
    %v929 = vmax.f32 %v921, 0.0
    %v930 = vmax.f32 %v922, 0.0
    %v931 = vmax.f32 %v923, 0.0
    %v932 = vmax.f32 %v924, 0.0
    %v933 = vmax.f32 %v925, 0.0
    %v934 = vmax.f32 %v926, 0.0
    %s935 = smul.u32 4, 64
    %s936 = smul.u32 %s935, 6
    %s937 = sshll.u32 %s936, 4
    %938 = dma.done %s68, %s937
    %v939 = vpack.c.bf16 %v931, %v927
    %v940 = vpack.c.bf16 %v932, %v928
    %v941 = vpack.c.bf16 %v933, %v929
    %v942 = vpack.c.bf16 %v934, %v930
    %v943 = vld [vmem:[#allocation3] sm:$0xff]
    %v944 = vld [vmem:[#allocation3 + $0x8] sm:$0xff]
    %v945 = vld [vmem:[#allocation3 + $0x10] sm:$0xff]
    %v946 = vld [vmem:[#allocation3 + $0x18] sm:$0xff]
    %v947 = vld [vmem:[#allocation3 + $0x20] sm:$0xff]
    %v948 = vld [vmem:[#allocation3 + $0x28] sm:$0xff]
    %v949 = vld [vmem:[#allocation3 + $0x30] sm:$0xff]
    %v950 = vld [vmem:[#allocation3 + $0x38] sm:$0xff]
    %v951 = vld [vmem:[#allocation3 + $0x40] sm:$0xff]
    %v952 = vld [vmem:[#allocation3 + $0x48] sm:$0xff]
    %v953 = vld [vmem:[#allocation3 + $0x50] sm:$0xff]
    %v954 = vld [vmem:[#allocation3 + $0x58] sm:$0xff]
    %v955 = vld [vmem:[#allocation3 + $0x60] sm:$0xff]
    %v956 = vld [vmem:[#allocation3 + $0x68] sm:$0xff]
    %v957 = vld [vmem:[#allocation3 + $0x70] sm:$0xff]
    %v958 = vld [vmem:[#allocation3 + $0x78] sm:$0xff]
    %v959 = vld [vmem:[#allocation3 + $0x80] sm:$0xff]
    %v960 = vld [vmem:[#allocation3 + $0x88] sm:$0xff]
    %v961 = vld [vmem:[#allocation3 + $0x90] sm:$0xff]
    %v962 = vld [vmem:[#allocation3 + $0x98] sm:$0xff]
    %v963 = vld [vmem:[#allocation3 + $0xa0] sm:$0xff]
    %v964 = vld [vmem:[#allocation3 + $0xa8] sm:$0xff]
    %v965 = vld [vmem:[#allocation3 + $0xb0] sm:$0xff]
    %v966 = vld [vmem:[#allocation3 + $0xb8] sm:$0xff]
    %v967 = vld [vmem:[#allocation3 + $0xc0] sm:$0xff]
    %v968 = vld [vmem:[#allocation3 + $0xc8] sm:$0xff]
    %v969 = vld [vmem:[#allocation3 + $0xd0] sm:$0xff]
    %v970 = vld [vmem:[#allocation3 + $0xd8] sm:$0xff]
    %v971 = vld [vmem:[#allocation3 + $0xe0] sm:$0xff]
    %v972 = vld [vmem:[#allocation3 + $0xe8] sm:$0xff]
    %v973 = vld [vmem:[#allocation3 + $0xf0] sm:$0xff]
    %v974 = vld [vmem:[#allocation3 + $0xf8] sm:$0xff]
    %v975 = vld [vmem:[#allocation3 + $0x100] sm:$0xff]
    %v976 = vld [vmem:[#allocation3 + $0x108] sm:$0xff]
    %v977 = vld [vmem:[#allocation3 + $0x110] sm:$0xff]
    %v978 = vld [vmem:[#allocation3 + $0x118] sm:$0xff]
    %v979 = vld [vmem:[#allocation3 + $0x120] sm:$0xff]
    %v980 = vld [vmem:[#allocation3 + $0x128] sm:$0xff]
    %v981 = vld [vmem:[#allocation3 + $0x130] sm:$0xff]
    %v982 = vld [vmem:[#allocation3 + $0x138] sm:$0xff]
    %v983 = vld [vmem:[#allocation3 + $0x140] sm:$0xff]
    %v984 = vld [vmem:[#allocation3 + $0x148] sm:$0xff]
    %v985 = vld [vmem:[#allocation3 + $0x150] sm:$0xff]
    %v986 = vld [vmem:[#allocation3 + $0x158] sm:$0xff]
    %v987 = vld [vmem:[#allocation3 + $0x160] sm:$0xff]
    %v988 = vld [vmem:[#allocation3 + $0x168] sm:$0xff]
    %v989 = vld [vmem:[#allocation3 + $0x170] sm:$0xff]
    %v990 = vld [vmem:[#allocation3 + $0x178] sm:$0xff]
    %v991 = vld [vmem:[#allocation3 + $0x180] sm:$0xff]
    %v992 = vld [vmem:[#allocation3 + $0x188] sm:$0xff]
    %v993 = vld [vmem:[#allocation3 + $0x190] sm:$0xff]
    %v994 = vld [vmem:[#allocation3 + $0x198] sm:$0xff]
    %v995 = vld [vmem:[#allocation3 + $0x1a0] sm:$0xff]
    %v996 = vld [vmem:[#allocation3 + $0x1a8] sm:$0xff]
    %v997 = vld [vmem:[#allocation3 + $0x1b0] sm:$0xff]
    %v998 = vld [vmem:[#allocation3 + $0x1b8] sm:$0xff]
    %v999 = vld [vmem:[#allocation3 + $0x1c0] sm:$0xff]
    %v1000 = vld [vmem:[#allocation3 + $0x1c8] sm:$0xff]
    %v1001 = vld [vmem:[#allocation3 + $0x1d0] sm:$0xff]
    %v1002 = vld [vmem:[#allocation3 + $0x1d8] sm:$0xff]
    %v1003 = vld [vmem:[#allocation3 + $0x1e0] sm:$0xff]
    %v1004 = vld [vmem:[#allocation3 + $0x1e8] sm:$0xff]
    %v1005 = vld [vmem:[#allocation3 + $0x1f0] sm:$0xff]
    %v1006 = vld [vmem:[#allocation3 + $0x1f8] sm:$0xff]
    %v1007 = vld [vmem:[#allocation3 + $0x200] sm:$0xff]
    %v1008 = vld [vmem:[#allocation3 + $0x208] sm:$0xff]
    %v1009 = vld [vmem:[#allocation3 + $0x210] sm:$0xff]
    %v1010 = vld [vmem:[#allocation3 + $0x218] sm:$0xff]
    %v1011 = vld [vmem:[#allocation3 + $0x220] sm:$0xff]
    %v1012 = vld [vmem:[#allocation3 + $0x228] sm:$0xff]
    %v1013 = vld [vmem:[#allocation3 + $0x230] sm:$0xff]
    %v1014 = vld [vmem:[#allocation3 + $0x238] sm:$0xff]
    %v1015 = vld [vmem:[#allocation3 + $0x240] sm:$0xff]
    %v1016 = vld [vmem:[#allocation3 + $0x248] sm:$0xff]
    %v1017 = vld [vmem:[#allocation3 + $0x250] sm:$0xff]
    %v1018 = vld [vmem:[#allocation3 + $0x258] sm:$0xff]
    %v1019 = vld [vmem:[#allocation3 + $0x260] sm:$0xff]
    %v1020 = vld [vmem:[#allocation3 + $0x268] sm:$0xff]
    %v1021 = vld [vmem:[#allocation3 + $0x270] sm:$0xff]
    %v1022 = vld [vmem:[#allocation3 + $0x278] sm:$0xff]
    %v1023 = vld [vmem:[#allocation3 + $0x280] sm:$0xff]
    %v1024 = vld [vmem:[#allocation3 + $0x288] sm:$0xff]
    %v1025 = vld [vmem:[#allocation3 + $0x290] sm:$0xff]
    %v1026 = vld [vmem:[#allocation3 + $0x298] sm:$0xff]
    %v1027 = vld [vmem:[#allocation3 + $0x2a0] sm:$0xff]
    %v1028 = vld [vmem:[#allocation3 + $0x2a8] sm:$0xff]
    %v1029 = vld [vmem:[#allocation3 + $0x2b0] sm:$0xff]
    %v1030 = vld [vmem:[#allocation3 + $0x2b8] sm:$0xff]
    %v1031 = vld [vmem:[#allocation3 + $0x2c0] sm:$0xff]
    %v1032 = vld [vmem:[#allocation3 + $0x2c8] sm:$0xff]
    %v1033 = vld [vmem:[#allocation3 + $0x2d0] sm:$0xff]
    %v1034 = vld [vmem:[#allocation3 + $0x2d8] sm:$0xff]
    %v1035 = vld [vmem:[#allocation3 + $0x2e0] sm:$0xff]
    %v1036 = vld [vmem:[#allocation3 + $0x2e8] sm:$0xff]
    %v1037 = vld [vmem:[#allocation3 + $0x2f0] sm:$0xff]
    %v1038 = vld [vmem:[#allocation3 + $0x2f8] sm:$0xff]
    %v1039 = vld [vmem:[#allocation3 + $0x300] sm:$0xff]
    %v1040 = vld [vmem:[#allocation3 + $0x308] sm:$0xff]
    %v1041 = vld [vmem:[#allocation3 + $0x310] sm:$0xff]
    %v1042 = vld [vmem:[#allocation3 + $0x318] sm:$0xff]
    %v1043 = vld [vmem:[#allocation3 + $0x320] sm:$0xff]
    %v1044 = vld [vmem:[#allocation3 + $0x328] sm:$0xff]
    %v1045 = vld [vmem:[#allocation3 + $0x330] sm:$0xff]
    %v1046 = vld [vmem:[#allocation3 + $0x338] sm:$0xff]
    %v1047 = vld [vmem:[#allocation3 + $0x340] sm:$0xff]
    %v1048 = vld [vmem:[#allocation3 + $0x348] sm:$0xff]
    %v1049 = vld [vmem:[#allocation3 + $0x350] sm:$0xff]
    %v1050 = vld [vmem:[#allocation3 + $0x358] sm:$0xff]
    %v1051 = vld [vmem:[#allocation3 + $0x360] sm:$0xff]
    %v1052 = vld [vmem:[#allocation3 + $0x368] sm:$0xff]
    %v1053 = vld [vmem:[#allocation3 + $0x370] sm:$0xff]
    %v1054 = vld [vmem:[#allocation3 + $0x378] sm:$0xff]
    %v1055 = vld [vmem:[#allocation3 + $0x380] sm:$0xff]
    %v1056 = vld [vmem:[#allocation3 + $0x388] sm:$0xff]
    %v1057 = vld [vmem:[#allocation3 + $0x390] sm:$0xff]
    %v1058 = vld [vmem:[#allocation3 + $0x398] sm:$0xff]
    %v1059 = vld [vmem:[#allocation3 + $0x3a0] sm:$0xff]
    %v1060 = vld [vmem:[#allocation3 + $0x3a8] sm:$0xff]
    %v1061 = vld [vmem:[#allocation3 + $0x3b0] sm:$0xff]
    %v1062 = vld [vmem:[#allocation3 + $0x3b8] sm:$0xff]
    %v1063 = vld [vmem:[#allocation3 + $0x3c0] sm:$0xff]
    %v1064 = vld [vmem:[#allocation3 + $0x3c8] sm:$0xff]
    %v1065 = vld [vmem:[#allocation3 + $0x3d0] sm:$0xff]
    %v1066 = vld [vmem:[#allocation3 + $0x3d8] sm:$0xff]
    %v1067 = vld [vmem:[#allocation3 + $0x3e0] sm:$0xff]
    %v1068 = vld [vmem:[#allocation3 + $0x3e8] sm:$0xff]
    %v1069 = vld [vmem:[#allocation3 + $0x3f0] sm:$0xff]
    %v1070 = vld [vmem:[#allocation3 + $0x3f8] sm:$0xff]
    %v1071 = vld [vmem:[#allocation3 + $0x400] sm:$0xff]
    %v1072 = vld [vmem:[#allocation3 + $0x408] sm:$0xff]
    %v1073 = vld [vmem:[#allocation3 + $0x410] sm:$0xff]
    %v1074 = vld [vmem:[#allocation3 + $0x418] sm:$0xff]
    %v1075 = vld [vmem:[#allocation3 + $0x420] sm:$0xff]
    %v1076 = vld [vmem:[#allocation3 + $0x428] sm:$0xff]
    %v1077 = vld [vmem:[#allocation3 + $0x430] sm:$0xff]
    %v1078 = vld [vmem:[#allocation3 + $0x438] sm:$0xff]
    %v1079 = vld [vmem:[#allocation3 + $0x440] sm:$0xff]
    %v1080 = vld [vmem:[#allocation3 + $0x448] sm:$0xff]
    %v1081 = vld [vmem:[#allocation3 + $0x450] sm:$0xff]
    %v1082 = vld [vmem:[#allocation3 + $0x458] sm:$0xff]
    %v1083 = vld [vmem:[#allocation3 + $0x460] sm:$0xff]
    %v1084 = vld [vmem:[#allocation3 + $0x468] sm:$0xff]
    %v1085 = vld [vmem:[#allocation3 + $0x470] sm:$0xff]
    %v1086 = vld [vmem:[#allocation3 + $0x478] sm:$0xff]
    %v1087 = vld [vmem:[#allocation3 + $0x480] sm:$0xff]
    %v1088 = vld [vmem:[#allocation3 + $0x488] sm:$0xff]
    %v1089 = vld [vmem:[#allocation3 + $0x490] sm:$0xff]
    %v1090 = vld [vmem:[#allocation3 + $0x498] sm:$0xff]
    %v1091 = vld [vmem:[#allocation3 + $0x4a0] sm:$0xff]
    %v1092 = vld [vmem:[#allocation3 + $0x4a8] sm:$0xff]
    %v1093 = vld [vmem:[#allocation3 + $0x4b0] sm:$0xff]
    %v1094 = vld [vmem:[#allocation3 + $0x4b8] sm:$0xff]
    %v1095 = vld [vmem:[#allocation3 + $0x4c0] sm:$0xff]
    %v1096 = vld [vmem:[#allocation3 + $0x4c8] sm:$0xff]
    %v1097 = vld [vmem:[#allocation3 + $0x4d0] sm:$0xff]
    %v1098 = vld [vmem:[#allocation3 + $0x4d8] sm:$0xff]
    %v1099 = vld [vmem:[#allocation3 + $0x4e0] sm:$0xff]
    %v1100 = vld [vmem:[#allocation3 + $0x4e8] sm:$0xff]
    %v1101 = vld [vmem:[#allocation3 + $0x4f0] sm:$0xff]
    %v1102 = vld [vmem:[#allocation3 + $0x4f8] sm:$0xff]
    %v1103 = vld [vmem:[#allocation3 + $0x500] sm:$0xff]
    %v1104 = vld [vmem:[#allocation3 + $0x508] sm:$0xff]
    %v1105 = vld [vmem:[#allocation3 + $0x510] sm:$0xff]
    %v1106 = vld [vmem:[#allocation3 + $0x518] sm:$0xff]
    %v1107 = vld [vmem:[#allocation3 + $0x520] sm:$0xff]
    %v1108 = vld [vmem:[#allocation3 + $0x528] sm:$0xff]
    %v1109 = vld [vmem:[#allocation3 + $0x530] sm:$0xff]
    %v1110 = vld [vmem:[#allocation3 + $0x538] sm:$0xff]
    %v1111 = vld [vmem:[#allocation3 + $0x540] sm:$0xff]
    %v1112 = vld [vmem:[#allocation3 + $0x548] sm:$0xff]
    %v1113 = vld [vmem:[#allocation3 + $0x550] sm:$0xff]
    %v1114 = vld [vmem:[#allocation3 + $0x558] sm:$0xff]
    %v1115 = vld [vmem:[#allocation3 + $0x560] sm:$0xff]
    %v1116 = vld [vmem:[#allocation3 + $0x568] sm:$0xff]
    %v1117 = vld [vmem:[#allocation3 + $0x570] sm:$0xff]
    %v1118 = vld [vmem:[#allocation3 + $0x578] sm:$0xff]
    %v1119 = vld [vmem:[#allocation3 + $0x580] sm:$0xff]
    %v1120 = vld [vmem:[#allocation3 + $0x588] sm:$0xff]
    %v1121 = vld [vmem:[#allocation3 + $0x590] sm:$0xff]
    %v1122 = vld [vmem:[#allocation3 + $0x598] sm:$0xff]
    %v1123 = vld [vmem:[#allocation3 + $0x5a0] sm:$0xff]
    %v1124 = vld [vmem:[#allocation3 + $0x5a8] sm:$0xff]
    %v1125 = vld [vmem:[#allocation3 + $0x5b0] sm:$0xff]
    %v1126 = vld [vmem:[#allocation3 + $0x5b8] sm:$0xff]
    %v1127 = vld [vmem:[#allocation3 + $0x5c0] sm:$0xff]
    %v1128 = vld [vmem:[#allocation3 + $0x5c8] sm:$0xff]
    %v1129 = vld [vmem:[#allocation3 + $0x5d0] sm:$0xff]
    %v1130 = vld [vmem:[#allocation3 + $0x5d8] sm:$0xff]
    %v1131 = vld [vmem:[#allocation3 + $0x5e0] sm:$0xff]
    %v1132 = vld [vmem:[#allocation3 + $0x5e8] sm:$0xff]
    %v1133 = vld [vmem:[#allocation3 + $0x5f0] sm:$0xff]
    %v1134 = vld [vmem:[#allocation3 + $0x5f8] sm:$0xff]
    %v1327 = vunpack.c.l.b16 %v943
    %v1328 = vunpack.c.h.b16 %v943
    %v1329 = vunpack.c.l.b16 %v944
    %v1330 = vunpack.c.h.b16 %v944
    %v1331 = vunpack.c.l.b16 %v945
    %v1332 = vunpack.c.h.b16 %v945
    %v1333 = vunpack.c.l.b16 %v946
    %v1334 = vunpack.c.h.b16 %v946
    %v1335 = vunpack.c.l.b16 %v947
    %v1336 = vunpack.c.h.b16 %v947
    %v1337 = vunpack.c.l.b16 %v948
    %v1338 = vunpack.c.h.b16 %v948
    %v1339 = vunpack.c.l.b16 %v949
    %v1340 = vunpack.c.h.b16 %v949
    %v1341 = vunpack.c.l.b16 %v950
    %v1342 = vunpack.c.h.b16 %v950
    %v1343 = vunpack.c.l.b16 %v951
    %v1344 = vunpack.c.h.b16 %v951
    %v1345 = vunpack.c.l.b16 %v952
    %v1346 = vunpack.c.h.b16 %v952
    %v1347 = vunpack.c.l.b16 %v953
    %v1348 = vunpack.c.h.b16 %v953
    %v1349 = vunpack.c.l.b16 %v954
    %v1350 = vunpack.c.h.b16 %v954
    %v1351 = vunpack.c.l.b16 %v955
    %v1352 = vunpack.c.h.b16 %v955
    %v1353 = vunpack.c.l.b16 %v956
    %v1354 = vunpack.c.h.b16 %v956
    %v1355 = vunpack.c.l.b16 %v957
    %v1356 = vunpack.c.h.b16 %v957
    %v1357 = vunpack.c.l.b16 %v958
    %v1358 = vunpack.c.h.b16 %v958
    %v1359 = vunpack.c.l.b16 %v959
    %v1360 = vunpack.c.h.b16 %v959
    %v1361 = vunpack.c.l.b16 %v960
    %v1362 = vunpack.c.h.b16 %v960
    %v1363 = vunpack.c.l.b16 %v961
    %v1364 = vunpack.c.h.b16 %v961
    %v1365 = vunpack.c.l.b16 %v962
    %v1366 = vunpack.c.h.b16 %v962
    %v1367 = vunpack.c.l.b16 %v963
    %v1368 = vunpack.c.h.b16 %v963
    %v1369 = vunpack.c.l.b16 %v964
    %v1370 = vunpack.c.h.b16 %v964
    %v1371 = vunpack.c.l.b16 %v965
    %v1372 = vunpack.c.h.b16 %v965
    %v1373 = vunpack.c.l.b16 %v966
    %v1374 = vunpack.c.h.b16 %v966
    %v1375 = vunpack.c.l.b16 %v967
    %v1376 = vunpack.c.h.b16 %v967
    %v1377 = vunpack.c.l.b16 %v968
    %v1378 = vunpack.c.h.b16 %v968
    %v1379 = vunpack.c.l.b16 %v969
    %v1380 = vunpack.c.h.b16 %v969
    %v1381 = vunpack.c.l.b16 %v970
    %v1382 = vunpack.c.h.b16 %v970
    %v1383 = vunpack.c.l.b16 %v971
    %v1384 = vunpack.c.h.b16 %v971
    %v1385 = vunpack.c.l.b16 %v972
    %v1386 = vunpack.c.h.b16 %v972
    %v1387 = vunpack.c.l.b16 %v973
    %v1388 = vunpack.c.h.b16 %v973
    %v1389 = vunpack.c.l.b16 %v974
    %v1390 = vunpack.c.h.b16 %v974
    %v1391 = vunpack.c.l.b16 %v975
    %v1392 = vunpack.c.h.b16 %v975
    %v1393 = vunpack.c.l.b16 %v976
    %v1394 = vunpack.c.h.b16 %v976
    %v1395 = vunpack.c.l.b16 %v977
    %v1396 = vunpack.c.h.b16 %v977
    %v1397 = vunpack.c.l.b16 %v978
    %v1398 = vunpack.c.h.b16 %v978
    %v1399 = vunpack.c.l.b16 %v979
    %v1400 = vunpack.c.h.b16 %v979
    %v1401 = vunpack.c.l.b16 %v980
    %v1402 = vunpack.c.h.b16 %v980
    %v1403 = vunpack.c.l.b16 %v981
    %v1404 = vunpack.c.h.b16 %v981
    %v1405 = vunpack.c.l.b16 %v982
    %v1406 = vunpack.c.h.b16 %v982
    %v1407 = vunpack.c.l.b16 %v983
    %v1408 = vunpack.c.h.b16 %v983
    %v1409 = vunpack.c.l.b16 %v984
    %v1410 = vunpack.c.h.b16 %v984
    %v1411 = vunpack.c.l.b16 %v985
    %v1412 = vunpack.c.h.b16 %v985
    %v1413 = vunpack.c.l.b16 %v986
    %v1414 = vunpack.c.h.b16 %v986
    %v1415 = vunpack.c.l.b16 %v987
    %v1416 = vunpack.c.h.b16 %v987
    %v1417 = vunpack.c.l.b16 %v988
    %v1418 = vunpack.c.h.b16 %v988
    %v1419 = vunpack.c.l.b16 %v989
    %v1420 = vunpack.c.h.b16 %v989
    %v1421 = vunpack.c.l.b16 %v990
    %v1422 = vunpack.c.h.b16 %v990
    %v1423 = vunpack.c.l.b16 %v991
    %v1424 = vunpack.c.h.b16 %v991
    %v1425 = vunpack.c.l.b16 %v992
    %v1426 = vunpack.c.h.b16 %v992
    %v1427 = vunpack.c.l.b16 %v993
    %v1428 = vunpack.c.h.b16 %v993
    %v1429 = vunpack.c.l.b16 %v994
    %v1430 = vunpack.c.h.b16 %v994
    %v1431 = vunpack.c.l.b16 %v995
    %v1432 = vunpack.c.h.b16 %v995
    %v1433 = vunpack.c.l.b16 %v996
    %v1434 = vunpack.c.h.b16 %v996
    %v1435 = vunpack.c.l.b16 %v997
    %v1436 = vunpack.c.h.b16 %v997
    %v1437 = vunpack.c.l.b16 %v998
    %v1438 = vunpack.c.h.b16 %v998
    %v1439 = vunpack.c.l.b16 %v999
    %v1440 = vunpack.c.h.b16 %v999
    %v1441 = vunpack.c.l.b16 %v1000
    %v1442 = vunpack.c.h.b16 %v1000
    %v1443 = vunpack.c.l.b16 %v1001
    %v1444 = vunpack.c.h.b16 %v1001
    %v1445 = vunpack.c.l.b16 %v1002
    %v1446 = vunpack.c.h.b16 %v1002
    %v1447 = vunpack.c.l.b16 %v1003
    %v1448 = vunpack.c.h.b16 %v1003
    %v1449 = vunpack.c.l.b16 %v1004
    %v1450 = vunpack.c.h.b16 %v1004
    %v1451 = vunpack.c.l.b16 %v1005
    %v1452 = vunpack.c.h.b16 %v1005
    %v1453 = vunpack.c.l.b16 %v1006
    %v1454 = vunpack.c.h.b16 %v1006
    %v1455 = vunpack.c.l.b16 %v1007
    %v1456 = vunpack.c.h.b16 %v1007
    %v1457 = vunpack.c.l.b16 %v1008
    %v1458 = vunpack.c.h.b16 %v1008
    %v1459 = vunpack.c.l.b16 %v1009
    %v1460 = vunpack.c.h.b16 %v1009
    %v1461 = vunpack.c.l.b16 %v1010
    %v1462 = vunpack.c.h.b16 %v1010
    %v1463 = vunpack.c.l.b16 %v1011
    %v1464 = vunpack.c.h.b16 %v1011
    %v1465 = vunpack.c.l.b16 %v1012
    %v1466 = vunpack.c.h.b16 %v1012
    %v1467 = vunpack.c.l.b16 %v1013
    %v1468 = vunpack.c.h.b16 %v1013
    %v1469 = vunpack.c.l.b16 %v1014
    %v1470 = vunpack.c.h.b16 %v1014
    %v1471 = vunpack.c.l.b16 %v1015
    %v1472 = vunpack.c.h.b16 %v1015
    %v1473 = vunpack.c.l.b16 %v1016
    %v1474 = vunpack.c.h.b16 %v1016
    %v1475 = vunpack.c.l.b16 %v1017
    %v1476 = vunpack.c.h.b16 %v1017
    %v1477 = vunpack.c.l.b16 %v1018
    %v1478 = vunpack.c.h.b16 %v1018
    %v1479 = vunpack.c.l.b16 %v1019
    %v1480 = vunpack.c.h.b16 %v1019
    %v1481 = vunpack.c.l.b16 %v1020
    %v1482 = vunpack.c.h.b16 %v1020
    %v1483 = vunpack.c.l.b16 %v1021
    %v1484 = vunpack.c.h.b16 %v1021
    %v1485 = vunpack.c.l.b16 %v1022
    %v1486 = vunpack.c.h.b16 %v1022
    %v1487 = vunpack.c.l.b16 %v1023
    %v1488 = vunpack.c.h.b16 %v1023
    %v1489 = vunpack.c.l.b16 %v1024
    %v1490 = vunpack.c.h.b16 %v1024
    %v1491 = vunpack.c.l.b16 %v1025
    %v1492 = vunpack.c.h.b16 %v1025
    %v1493 = vunpack.c.l.b16 %v1026
    %v1494 = vunpack.c.h.b16 %v1026
    %v1495 = vunpack.c.l.b16 %v1027
    %v1496 = vunpack.c.h.b16 %v1027
    %v1497 = vunpack.c.l.b16 %v1028
    %v1498 = vunpack.c.h.b16 %v1028
    %v1499 = vunpack.c.l.b16 %v1029
    %v1500 = vunpack.c.h.b16 %v1029
    %v1501 = vunpack.c.l.b16 %v1030
    %v1502 = vunpack.c.h.b16 %v1030
    %v1503 = vunpack.c.l.b16 %v1031
    %v1504 = vunpack.c.h.b16 %v1031
    %v1505 = vunpack.c.l.b16 %v1032
    %v1506 = vunpack.c.h.b16 %v1032
    %v1507 = vunpack.c.l.b16 %v1033
    %v1508 = vunpack.c.h.b16 %v1033
    %v1509 = vunpack.c.l.b16 %v1034
    %v1510 = vunpack.c.h.b16 %v1034
    %v1511 = vunpack.c.l.b16 %v1035
    %v1512 = vunpack.c.h.b16 %v1035
    %v1513 = vunpack.c.l.b16 %v1036
    %v1514 = vunpack.c.h.b16 %v1036
    %v1515 = vunpack.c.l.b16 %v1037
    %v1516 = vunpack.c.h.b16 %v1037
    %v1517 = vunpack.c.l.b16 %v1038
    %v1518 = vunpack.c.h.b16 %v1038
    %v1519 = vunpack.c.l.b16 %v1039
    %v1520 = vunpack.c.h.b16 %v1039
    %v1521 = vunpack.c.l.b16 %v1040
    %v1522 = vunpack.c.h.b16 %v1040
    %v1523 = vunpack.c.l.b16 %v1041
    %v1524 = vunpack.c.h.b16 %v1041
    %v1525 = vunpack.c.l.b16 %v1042
    %v1526 = vunpack.c.h.b16 %v1042
    %v1527 = vunpack.c.l.b16 %v1043
    %v1528 = vunpack.c.h.b16 %v1043
    %v1529 = vunpack.c.l.b16 %v1044
    %v1530 = vunpack.c.h.b16 %v1044
    %v1531 = vunpack.c.l.b16 %v1045
    %v1532 = vunpack.c.h.b16 %v1045
    %v1533 = vunpack.c.l.b16 %v1046
    %v1534 = vunpack.c.h.b16 %v1046
    %v1535 = vunpack.c.l.b16 %v1047
    %v1536 = vunpack.c.h.b16 %v1047
    %v1537 = vunpack.c.l.b16 %v1048
    %v1538 = vunpack.c.h.b16 %v1048
    %v1539 = vunpack.c.l.b16 %v1049
    %v1540 = vunpack.c.h.b16 %v1049
    %v1541 = vunpack.c.l.b16 %v1050
    %v1542 = vunpack.c.h.b16 %v1050
    %v1543 = vunpack.c.l.b16 %v1051
    %v1544 = vunpack.c.h.b16 %v1051
    %v1545 = vunpack.c.l.b16 %v1052
    %v1546 = vunpack.c.h.b16 %v1052
    %v1547 = vunpack.c.l.b16 %v1053
    %v1548 = vunpack.c.h.b16 %v1053
    %v1549 = vunpack.c.l.b16 %v1054
    %v1550 = vunpack.c.h.b16 %v1054
    %v1551 = vunpack.c.l.b16 %v1055
    %v1552 = vunpack.c.h.b16 %v1055
    %v1553 = vunpack.c.l.b16 %v1056
    %v1554 = vunpack.c.h.b16 %v1056
    %v1555 = vunpack.c.l.b16 %v1057
    %v1556 = vunpack.c.h.b16 %v1057
    %v1557 = vunpack.c.l.b16 %v1058
    %v1558 = vunpack.c.h.b16 %v1058
    %v1559 = vunpack.c.l.b16 %v1059
    %v1560 = vunpack.c.h.b16 %v1059
    %v1561 = vunpack.c.l.b16 %v1060
    %v1562 = vunpack.c.h.b16 %v1060
    %v1563 = vunpack.c.l.b16 %v1061
    %v1564 = vunpack.c.h.b16 %v1061
    %v1565 = vunpack.c.l.b16 %v1062
    %v1566 = vunpack.c.h.b16 %v1062
    %v1567 = vunpack.c.l.b16 %v1063
    %v1568 = vunpack.c.h.b16 %v1063
    %v1569 = vunpack.c.l.b16 %v1064
    %v1570 = vunpack.c.h.b16 %v1064
    %v1571 = vunpack.c.l.b16 %v1065
    %v1572 = vunpack.c.h.b16 %v1065
    %v1573 = vunpack.c.l.b16 %v1066
    %v1574 = vunpack.c.h.b16 %v1066
    %v1575 = vunpack.c.l.b16 %v1067
    %v1576 = vunpack.c.h.b16 %v1067
    %v1577 = vunpack.c.l.b16 %v1068
    %v1578 = vunpack.c.h.b16 %v1068
    %v1579 = vunpack.c.l.b16 %v1069
    %v1580 = vunpack.c.h.b16 %v1069
    %v1581 = vunpack.c.l.b16 %v1070
    %v1582 = vunpack.c.h.b16 %v1070
    %v1583 = vunpack.c.l.b16 %v1071
    %v1584 = vunpack.c.h.b16 %v1071
    %v1585 = vunpack.c.l.b16 %v1072
    %v1586 = vunpack.c.h.b16 %v1072
    %v1587 = vunpack.c.l.b16 %v1073
    %v1588 = vunpack.c.h.b16 %v1073
    %v1589 = vunpack.c.l.b16 %v1074
    %v1590 = vunpack.c.h.b16 %v1074
    %v1591 = vunpack.c.l.b16 %v1075
    %v1592 = vunpack.c.h.b16 %v1075
    %v1593 = vunpack.c.l.b16 %v1076
    %v1594 = vunpack.c.h.b16 %v1076
    %v1595 = vunpack.c.l.b16 %v1077
    %v1596 = vunpack.c.h.b16 %v1077
    %v1597 = vunpack.c.l.b16 %v1078
    %v1598 = vunpack.c.h.b16 %v1078
    %v1599 = vunpack.c.l.b16 %v1079
    %v1600 = vunpack.c.h.b16 %v1079
    %v1601 = vunpack.c.l.b16 %v1080
    %v1602 = vunpack.c.h.b16 %v1080
    %v1603 = vunpack.c.l.b16 %v1081
    %v1604 = vunpack.c.h.b16 %v1081
    %v1605 = vunpack.c.l.b16 %v1082
    %v1606 = vunpack.c.h.b16 %v1082
    %v1607 = vunpack.c.l.b16 %v1083
    %v1608 = vunpack.c.h.b16 %v1083
    %v1609 = vunpack.c.l.b16 %v1084
    %v1610 = vunpack.c.h.b16 %v1084
    %v1611 = vunpack.c.l.b16 %v1085
    %v1612 = vunpack.c.h.b16 %v1085
    %v1613 = vunpack.c.l.b16 %v1086
    %v1614 = vunpack.c.h.b16 %v1086
    %v1615 = vunpack.c.l.b16 %v1087
    %v1616 = vunpack.c.h.b16 %v1087
    %v1617 = vunpack.c.l.b16 %v1088
    %v1618 = vunpack.c.h.b16 %v1088
    %v1619 = vunpack.c.l.b16 %v1089
    %v1620 = vunpack.c.h.b16 %v1089
    %v1621 = vunpack.c.l.b16 %v1090
    %v1622 = vunpack.c.h.b16 %v1090
    %v1623 = vunpack.c.l.b16 %v1091
    %v1624 = vunpack.c.h.b16 %v1091
    %v1625 = vunpack.c.l.b16 %v1092
    %v1626 = vunpack.c.h.b16 %v1092
    %v1627 = vunpack.c.l.b16 %v1093
    %v1628 = vunpack.c.h.b16 %v1093
    %v1629 = vunpack.c.l.b16 %v1094
    %v1630 = vunpack.c.h.b16 %v1094
    %v1631 = vunpack.c.l.b16 %v1095
    %v1632 = vunpack.c.h.b16 %v1095
    %v1633 = vunpack.c.l.b16 %v1096
    %v1634 = vunpack.c.h.b16 %v1096
    %v1635 = vunpack.c.l.b16 %v1097
    %v1636 = vunpack.c.h.b16 %v1097
    %v1637 = vunpack.c.l.b16 %v1098
    %v1638 = vunpack.c.h.b16 %v1098
    %v1639 = vunpack.c.l.b16 %v1099
    %v1640 = vunpack.c.h.b16 %v1099
    %v1641 = vunpack.c.l.b16 %v1100
    %v1642 = vunpack.c.h.b16 %v1100
    %v1643 = vunpack.c.l.b16 %v1101
    %v1644 = vunpack.c.h.b16 %v1101
    %v1645 = vunpack.c.l.b16 %v1102
    %v1646 = vunpack.c.h.b16 %v1102
    %v1647 = vunpack.c.l.b16 %v1103
    %v1648 = vunpack.c.h.b16 %v1103
    %v1649 = vunpack.c.l.b16 %v1104
    %v1650 = vunpack.c.h.b16 %v1104
    %v1651 = vunpack.c.l.b16 %v1105
    %v1652 = vunpack.c.h.b16 %v1105
    %v1653 = vunpack.c.l.b16 %v1106
    %v1654 = vunpack.c.h.b16 %v1106
    %v1655 = vunpack.c.l.b16 %v1107
    %v1656 = vunpack.c.h.b16 %v1107
    %v1657 = vunpack.c.l.b16 %v1108
    %v1658 = vunpack.c.h.b16 %v1108
    %v1659 = vunpack.c.l.b16 %v1109
    %v1660 = vunpack.c.h.b16 %v1109
    %v1661 = vunpack.c.l.b16 %v1110
    %v1662 = vunpack.c.h.b16 %v1110
    %v1663 = vunpack.c.l.b16 %v1111
    %v1664 = vunpack.c.h.b16 %v1111
    %v1665 = vunpack.c.l.b16 %v1112
    %v1666 = vunpack.c.h.b16 %v1112
    %v1667 = vunpack.c.l.b16 %v1113
    %v1668 = vunpack.c.h.b16 %v1113
    %v1669 = vunpack.c.l.b16 %v1114
    %v1670 = vunpack.c.h.b16 %v1114
    %v1671 = vunpack.c.l.b16 %v1115
    %v1672 = vunpack.c.h.b16 %v1115
    %v1673 = vunpack.c.l.b16 %v1116
    %v1674 = vunpack.c.h.b16 %v1116
    %v1675 = vunpack.c.l.b16 %v1117
    %v1676 = vunpack.c.h.b16 %v1117
    %v1677 = vunpack.c.l.b16 %v1118
    %v1678 = vunpack.c.h.b16 %v1118
    %v1679 = vunpack.c.l.b16 %v1119
    %v1680 = vunpack.c.h.b16 %v1119
    %v1681 = vunpack.c.l.b16 %v1120
    %v1682 = vunpack.c.h.b16 %v1120
    %v1683 = vunpack.c.l.b16 %v1121
    %v1684 = vunpack.c.h.b16 %v1121
    %v1685 = vunpack.c.l.b16 %v1122
    %v1686 = vunpack.c.h.b16 %v1122
    %v1687 = vunpack.c.l.b16 %v1123
    %v1688 = vunpack.c.h.b16 %v1123
    %v1689 = vunpack.c.l.b16 %v1124
    %v1690 = vunpack.c.h.b16 %v1124
    %v1691 = vunpack.c.l.b16 %v1125
    %v1692 = vunpack.c.h.b16 %v1125
    %v1693 = vunpack.c.l.b16 %v1126
    %v1694 = vunpack.c.h.b16 %v1126
    %v1695 = vunpack.c.l.b16 %v1127
    %v1696 = vunpack.c.h.b16 %v1127
    %v1697 = vunpack.c.l.b16 %v1128
    %v1698 = vunpack.c.h.b16 %v1128
    %v1699 = vunpack.c.l.b16 %v1129
    %v1700 = vunpack.c.h.b16 %v1129
    %v1701 = vunpack.c.l.b16 %v1130
    %v1702 = vunpack.c.h.b16 %v1130
    %v1703 = vunpack.c.l.b16 %v1131
    %v1704 = vunpack.c.h.b16 %v1131
    %v1705 = vunpack.c.l.b16 %v1132
    %v1706 = vunpack.c.h.b16 %v1132
    %v1707 = vunpack.c.l.b16 %v1133
    %v1708 = vunpack.c.h.b16 %v1133
    %v1709 = vunpack.c.l.b16 %v1134
    %v1710 = vunpack.c.h.b16 %v1134
    %v1711 = vpack.c.b16 %v1333, %v1327
    %v1712 = vpack.c.b16 %v1334, %v1328
    %v1713 = vpack.c.b16 %v1335, %v1329
    %v1714 = vpack.c.b16 %v1336, %v1330
    %v1715 = vpack.c.b16 %v1337, %v1331
    %v1716 = vpack.c.b16 %v1338, %v1332
    %v1717 = vpack.c.b16 %v1345, %v1339
    %v1718 = vpack.c.b16 %v1346, %v1340
    %v1719 = vpack.c.b16 %v1347, %v1341
    %v1720 = vpack.c.b16 %v1348, %v1342
    %v1721 = vpack.c.b16 %v1349, %v1343
    %v1722 = vpack.c.b16 %v1350, %v1344
    %v1723 = vpack.c.b16 %v1357, %v1351
    %v1724 = vpack.c.b16 %v1358, %v1352
    %v1725 = vpack.c.b16 %v1359, %v1353
    %v1726 = vpack.c.b16 %v1360, %v1354
    %v1727 = vpack.c.b16 %v1361, %v1355
    %v1728 = vpack.c.b16 %v1362, %v1356
    %v1729 = vpack.c.b16 %v1369, %v1363
    %v1730 = vpack.c.b16 %v1370, %v1364
    %v1731 = vpack.c.b16 %v1371, %v1365
    %v1732 = vpack.c.b16 %v1372, %v1366
    %v1733 = vpack.c.b16 %v1373, %v1367
    %v1734 = vpack.c.b16 %v1374, %v1368
    %v1735 = vpack.c.b16 %v1381, %v1375
    %v1736 = vpack.c.b16 %v1382, %v1376
    %v1737 = vpack.c.b16 %v1383, %v1377
    %v1738 = vpack.c.b16 %v1384, %v1378
    %v1739 = vpack.c.b16 %v1385, %v1379
    %v1740 = vpack.c.b16 %v1386, %v1380
    %v1741 = vpack.c.b16 %v1393, %v1387
    %v1742 = vpack.c.b16 %v1394, %v1388
    %v1743 = vpack.c.b16 %v1395, %v1389
    %v1744 = vpack.c.b16 %v1396, %v1390
    %v1745 = vpack.c.b16 %v1397, %v1391
    %v1746 = vpack.c.b16 %v1398, %v1392
    %v1747 = vpack.c.b16 %v1405, %v1399
    %v1748 = vpack.c.b16 %v1406, %v1400
    %v1749 = vpack.c.b16 %v1407, %v1401
    %v1750 = vpack.c.b16 %v1408, %v1402
    %v1751 = vpack.c.b16 %v1409, %v1403
    %v1752 = vpack.c.b16 %v1410, %v1404
    %v1753 = vpack.c.b16 %v1417, %v1411
    %v1754 = vpack.c.b16 %v1418, %v1412
    %v1755 = vpack.c.b16 %v1419, %v1413
    %v1756 = vpack.c.b16 %v1420, %v1414
    %v1757 = vpack.c.b16 %v1421, %v1415
    %v1758 = vpack.c.b16 %v1422, %v1416
    %v1759 = vpack.c.b16 %v1429, %v1423
    %v1760 = vpack.c.b16 %v1430, %v1424
    %v1761 = vpack.c.b16 %v1431, %v1425
    %v1762 = vpack.c.b16 %v1432, %v1426
    %v1763 = vpack.c.b16 %v1433, %v1427
    %v1764 = vpack.c.b16 %v1434, %v1428
    %v1765 = vpack.c.b16 %v1441, %v1435
    %v1766 = vpack.c.b16 %v1442, %v1436
    %v1767 = vpack.c.b16 %v1443, %v1437
    %v1768 = vpack.c.b16 %v1444, %v1438
    %v1769 = vpack.c.b16 %v1445, %v1439
    %v1770 = vpack.c.b16 %v1446, %v1440
    %v1771 = vpack.c.b16 %v1453, %v1447
    %v1772 = vpack.c.b16 %v1454, %v1448
    %v1773 = vpack.c.b16 %v1455, %v1449
    %v1774 = vpack.c.b16 %v1456, %v1450
    %v1775 = vpack.c.b16 %v1457, %v1451
    %v1776 = vpack.c.b16 %v1458, %v1452
    %v1777 = vpack.c.b16 %v1465, %v1459
    %v1778 = vpack.c.b16 %v1466, %v1460
    %v1779 = vpack.c.b16 %v1467, %v1461
    %v1780 = vpack.c.b16 %v1468, %v1462
    %v1781 = vpack.c.b16 %v1469, %v1463
    %v1782 = vpack.c.b16 %v1470, %v1464
    %v1783 = vpack.c.b16 %v1477, %v1471
    %v1784 = vpack.c.b16 %v1478, %v1472
    %v1785 = vpack.c.b16 %v1479, %v1473
    %v1786 = vpack.c.b16 %v1480, %v1474
    %v1787 = vpack.c.b16 %v1481, %v1475
    %v1788 = vpack.c.b16 %v1482, %v1476
    %v1789 = vpack.c.b16 %v1489, %v1483
    %v1790 = vpack.c.b16 %v1490, %v1484
    %v1791 = vpack.c.b16 %v1491, %v1485
    %v1792 = vpack.c.b16 %v1492, %v1486
    %v1793 = vpack.c.b16 %v1493, %v1487
    %v1794 = vpack.c.b16 %v1494, %v1488
    %v1795 = vpack.c.b16 %v1501, %v1495
    %v1796 = vpack.c.b16 %v1502, %v1496
    %v1797 = vpack.c.b16 %v1503, %v1497
    %v1798 = vpack.c.b16 %v1504, %v1498
    %v1799 = vpack.c.b16 %v1505, %v1499
    %v1800 = vpack.c.b16 %v1506, %v1500
    %v1801 = vpack.c.b16 %v1513, %v1507
    %v1802 = vpack.c.b16 %v1514, %v1508
    %v1803 = vpack.c.b16 %v1515, %v1509
    %v1804 = vpack.c.b16 %v1516, %v1510
    %v1805 = vpack.c.b16 %v1517, %v1511
    %v1806 = vpack.c.b16 %v1518, %v1512
    %v1807 = vpack.c.b16 %v1525, %v1519
    %v1808 = vpack.c.b16 %v1526, %v1520
    %v1809 = vpack.c.b16 %v1527, %v1521
    %v1810 = vpack.c.b16 %v1528, %v1522
    %v1811 = vpack.c.b16 %v1529, %v1523
    %v1812 = vpack.c.b16 %v1530, %v1524
    %v1813 = vpack.c.b16 %v1537, %v1531
    %v1814 = vpack.c.b16 %v1538, %v1532
    %v1815 = vpack.c.b16 %v1539, %v1533
    %v1816 = vpack.c.b16 %v1540, %v1534
    %v1817 = vpack.c.b16 %v1541, %v1535
    %v1818 = vpack.c.b16 %v1542, %v1536
    %v1819 = vpack.c.b16 %v1549, %v1543
    %v1820 = vpack.c.b16 %v1550, %v1544
    %v1821 = vpack.c.b16 %v1551, %v1545
    %v1822 = vpack.c.b16 %v1552, %v1546
    %v1823 = vpack.c.b16 %v1553, %v1547
    %v1824 = vpack.c.b16 %v1554, %v1548
    %v1825 = vpack.c.b16 %v1561, %v1555
    %v1826 = vpack.c.b16 %v1562, %v1556
    %v1827 = vpack.c.b16 %v1563, %v1557
    %v1828 = vpack.c.b16 %v1564, %v1558
    %v1829 = vpack.c.b16 %v1565, %v1559
    %v1830 = vpack.c.b16 %v1566, %v1560
    %v1831 = vpack.c.b16 %v1573, %v1567
    %v1832 = vpack.c.b16 %v1574, %v1568
    %v1833 = vpack.c.b16 %v1575, %v1569
    %v1834 = vpack.c.b16 %v1576, %v1570
    %v1835 = vpack.c.b16 %v1577, %v1571
    %v1836 = vpack.c.b16 %v1578, %v1572
    %v1837 = vpack.c.b16 %v1585, %v1579
    %v1838 = vpack.c.b16 %v1586, %v1580
    %v1839 = vpack.c.b16 %v1587, %v1581
    %v1840 = vpack.c.b16 %v1588, %v1582
    %v1841 = vpack.c.b16 %v1589, %v1583
    %v1842 = vpack.c.b16 %v1590, %v1584
    %v1843 = vpack.c.b16 %v1597, %v1591
    %v1844 = vpack.c.b16 %v1598, %v1592
    %v1845 = vpack.c.b16 %v1599, %v1593
    %v1846 = vpack.c.b16 %v1600, %v1594
    %v1847 = vpack.c.b16 %v1601, %v1595
    %v1848 = vpack.c.b16 %v1602, %v1596
    %v1849 = vpack.c.b16 %v1609, %v1603
    %v1850 = vpack.c.b16 %v1610, %v1604
    %v1851 = vpack.c.b16 %v1611, %v1605
    %v1852 = vpack.c.b16 %v1612, %v1606
    %v1853 = vpack.c.b16 %v1613, %v1607
    %v1854 = vpack.c.b16 %v1614, %v1608
    %v1855 = vpack.c.b16 %v1621, %v1615
    %v1856 = vpack.c.b16 %v1622, %v1616
    %v1857 = vpack.c.b16 %v1623, %v1617
    %v1858 = vpack.c.b16 %v1624, %v1618
    %v1859 = vpack.c.b16 %v1625, %v1619
    %v1860 = vpack.c.b16 %v1626, %v1620
    %v1861 = vpack.c.b16 %v1633, %v1627
    %v1862 = vpack.c.b16 %v1634, %v1628
    %v1863 = vpack.c.b16 %v1635, %v1629
    %v1864 = vpack.c.b16 %v1636, %v1630
    %v1865 = vpack.c.b16 %v1637, %v1631
    %v1866 = vpack.c.b16 %v1638, %v1632
    %v1867 = vpack.c.b16 %v1645, %v1639
    %v1868 = vpack.c.b16 %v1646, %v1640
    %v1869 = vpack.c.b16 %v1647, %v1641
    %v1870 = vpack.c.b16 %v1648, %v1642
    %v1871 = vpack.c.b16 %v1649, %v1643
    %v1872 = vpack.c.b16 %v1650, %v1644
    %v1873 = vpack.c.b16 %v1657, %v1651
    %v1874 = vpack.c.b16 %v1658, %v1652
    %v1875 = vpack.c.b16 %v1659, %v1653
    %v1876 = vpack.c.b16 %v1660, %v1654
    %v1877 = vpack.c.b16 %v1661, %v1655
    %v1878 = vpack.c.b16 %v1662, %v1656
    %v1879 = vpack.c.b16 %v1669, %v1663
    %v1880 = vpack.c.b16 %v1670, %v1664
    %v1881 = vpack.c.b16 %v1671, %v1665
    %v1882 = vpack.c.b16 %v1672, %v1666
    %v1883 = vpack.c.b16 %v1673, %v1667
    %v1884 = vpack.c.b16 %v1674, %v1668
    %v1885 = vpack.c.b16 %v1681, %v1675
    %v1886 = vpack.c.b16 %v1682, %v1676
    %v1887 = vpack.c.b16 %v1683, %v1677
    %v1888 = vpack.c.b16 %v1684, %v1678
    %v1889 = vpack.c.b16 %v1685, %v1679
    %v1890 = vpack.c.b16 %v1686, %v1680
    %v1891 = vpack.c.b16 %v1693, %v1687
    %v1892 = vpack.c.b16 %v1694, %v1688
    %v1893 = vpack.c.b16 %v1695, %v1689
    %v1894 = vpack.c.b16 %v1696, %v1690
    %v1895 = vpack.c.b16 %v1697, %v1691
    %v1896 = vpack.c.b16 %v1698, %v1692
    %v1897 = vpack.c.b16 %v1705, %v1699
    %v1898 = vpack.c.b16 %v1706, %v1700
    %v1899 = vpack.c.b16 %v1707, %v1701
    %v1900 = vpack.c.b16 %v1708, %v1702
    %v1901 = vpack.c.b16 %v1709, %v1703
    %v1902 = vpack.c.b16 %v1710, %v1704
    %2095 = vmatprep.subr.bf16.mxu0 %v1754
    %2096 = vmatpush1.bf16.msra.mxu0 %v1753
    %2097 = vmatprep.subr.bf16.mxu0 %v1748
    %2098 = vmatpush1.bf16.msra.mxu0 %v1747
    %2099 = vmatprep.subr.bf16.mxu0 %v1742
    %2100 = vmatpush1.bf16.msra.mxu0 %v1741
    %2101 = vmatprep.subr.bf16.mxu0 %v1736
    %2102 = vmatpush1.bf16.msra.mxu0 %v1735
    %2103 = vmatprep.subr.bf16.mxu0 %v1730
    %2104 = vmatpush1.bf16.msra.mxu0 %v1729
    %2105 = vmatprep.subr.bf16.mxu0 %v1724
    %2106 = vmatpush1.bf16.msra.mxu0 %v1723
    %2107 = vmatprep.subr.bf16.mxu0 %v1718
    %2108 = vmatpush1.bf16.msra.mxu0 %v1717
    %2109 = vmatprep.subr.bf16.mxu0 %v1712
    %2110 = vmatpush1.bf16.msra.mxu0 %v1711
    %2111 = vmatprep.subr.bf16.mxu0 %v1802
    %2112 = vmatpush2.bf16.msra.mxu0 %v1801
    %2113 = vmatprep.subr.bf16.mxu0 %v1796
    %2114 = vmatpush2.bf16.msra.mxu0 %v1795
    %2115 = vmatprep.subr.bf16.mxu0 %v1790
    %2116 = vmatpush2.bf16.msra.mxu0 %v1789
    %2117 = vmatprep.subr.bf16.mxu0 %v1784
    %2118 = vmatpush2.bf16.msra.mxu0 %v1783
    %2119 = vmatprep.subr.bf16.mxu0 %v1778
    %2120 = vmatpush2.bf16.msra.mxu0 %v1777
    %2121 = vmatprep.subr.bf16.mxu0 %v1772
    %2122 = vmatpush2.bf16.msra.mxu0 %v1771
    %2123 = vmatprep.subr.bf16.mxu0 %v1766
    %2124 = vmatpush2.bf16.msra.mxu0 %v1765
    %2125 = vmatprep.subr.bf16.mxu0 %v1760
    %2126 = vmatpush2.bf16.msra.mxu0 %v1759
    %2127 = vmatprep.mubr.bf16.mxu0 %v940
    %2128 = vmatmul.mubr.bf16.gmra.mxu0 %v939
    %v2129 = vpop.f32.mrf.mxu0
    %v2130 = vadd.f32 0.0, %v2129
    %v2131 = vpop.f32.mrf.mxu0
    %v2132 = vadd.f32 0.0, %v2131
    %v2133 = vpop.f32.mrf.mxu0
    %v2134 = vadd.f32 0.0, %v2133
    %v2135 = vpop.f32.mrf.mxu0
    %v2136 = vadd.f32 0.0, %v2135
    %2137 = vdwg.mxu0
    %2138 = vmatprep.subr.bf16.mxu0 %v1850
    %2139 = vmatpush1.bf16.msra.mxu0 %v1849
    %2140 = vmatprep.subr.bf16.mxu0 %v1844
    %2141 = vmatpush1.bf16.msra.mxu0 %v1843
    %2142 = vmatprep.subr.bf16.mxu0 %v1838
    %2143 = vmatpush1.bf16.msra.mxu0 %v1837
    %2144 = vmatprep.subr.bf16.mxu0 %v1832
    %2145 = vmatpush1.bf16.msra.mxu0 %v1831
    %2146 = vmatprep.subr.bf16.mxu0 %v1826
    %2147 = vmatpush1.bf16.msra.mxu0 %v1825
    %2148 = vmatprep.subr.bf16.mxu0 %v1820
    %2149 = vmatpush1.bf16.msra.mxu0 %v1819
    %2150 = vmatprep.subr.bf16.mxu0 %v1814
    %2151 = vmatpush1.bf16.msra.mxu0 %v1813
    %2152 = vmatprep.subr.bf16.mxu0 %v1808
    %2153 = vmatpush1.bf16.msra.mxu0 %v1807
    %2154 = vmatprep.subr.bf16.mxu0 %v1898
    %2155 = vmatpush2.bf16.msra.mxu0 %v1897
    %2156 = vmatprep.subr.bf16.mxu0 %v1892
    %2157 = vmatpush2.bf16.msra.mxu0 %v1891
    %2158 = vmatprep.subr.bf16.mxu0 %v1886
    %2159 = vmatpush2.bf16.msra.mxu0 %v1885
    %2160 = vmatprep.subr.bf16.mxu0 %v1880
    %2161 = vmatpush2.bf16.msra.mxu0 %v1879
    %2162 = vmatprep.subr.bf16.mxu0 %v1874
    %2163 = vmatpush2.bf16.msra.mxu0 %v1873
    %2164 = vmatprep.subr.bf16.mxu0 %v1868
    %2165 = vmatpush2.bf16.msra.mxu0 %v1867
    %2166 = vmatprep.subr.bf16.mxu0 %v1862
    %2167 = vmatpush2.bf16.msra.mxu0 %v1861
    %2168 = vmatprep.subr.bf16.mxu0 %v1856
    %2169 = vmatpush2.bf16.msra.mxu0 %v1855
    %2170 = vmatprep.mubr.bf16.mxu0 %v942
    %2171 = vmatmul.mubr.bf16.gmra.mxu0 %v941
    %v2172 = vpop.f32.mrf.mxu0
    %v2173 = vadd.f32 %v2130, %v2172
    %v2174 = vpop.f32.mrf.mxu0
    %v2175 = vadd.f32 %v2132, %v2174
    %v2176 = vpop.f32.mrf.mxu0
    %v2177 = vadd.f32 %v2134, %v2176
    %v2178 = vpop.f32.mrf.mxu0
    %v2179 = vadd.f32 %v2136, %v2178
    %2180 = vdwg.mxu0
    %2181 = vmatprep.subr.bf16.mxu0 %v1756
    %2182 = vmatpush1.bf16.msra.mxu0 %v1755
    %2183 = vmatprep.subr.bf16.mxu0 %v1750
    %2184 = vmatpush1.bf16.msra.mxu0 %v1749
    %2185 = vmatprep.subr.bf16.mxu0 %v1744
    %2186 = vmatpush1.bf16.msra.mxu0 %v1743
    %2187 = vmatprep.subr.bf16.mxu0 %v1738
    %2188 = vmatpush1.bf16.msra.mxu0 %v1737
    %2189 = vmatprep.subr.bf16.mxu0 %v1732
    %2190 = vmatpush1.bf16.msra.mxu0 %v1731
    %2191 = vmatprep.subr.bf16.mxu0 %v1726
    %2192 = vmatpush1.bf16.msra.mxu0 %v1725
    %2193 = vmatprep.subr.bf16.mxu0 %v1720
    %2194 = vmatpush1.bf16.msra.mxu0 %v1719
    %2195 = vmatprep.subr.bf16.mxu0 %v1714
    %2196 = vmatpush1.bf16.msra.mxu0 %v1713
    %2197 = vmatprep.subr.bf16.mxu0 %v1804
    %2198 = vmatpush2.bf16.msra.mxu0 %v1803
    %2199 = vmatprep.subr.bf16.mxu0 %v1798
    %2200 = vmatpush2.bf16.msra.mxu0 %v1797
    %2201 = vmatprep.subr.bf16.mxu0 %v1792
    %2202 = vmatpush2.bf16.msra.mxu0 %v1791
    %2203 = vmatprep.subr.bf16.mxu0 %v1786
    %2204 = vmatpush2.bf16.msra.mxu0 %v1785
    %2205 = vmatprep.subr.bf16.mxu0 %v1780
    %2206 = vmatpush2.bf16.msra.mxu0 %v1779
    %2207 = vmatprep.subr.bf16.mxu0 %v1774
    %2208 = vmatpush2.bf16.msra.mxu0 %v1773
    %2209 = vmatprep.subr.bf16.mxu0 %v1768
    %2210 = vmatpush2.bf16.msra.mxu0 %v1767
    %2211 = vmatprep.subr.bf16.mxu0 %v1762
    %2212 = vmatpush2.bf16.msra.mxu0 %v1761
    %2213 = vmatprep.mubr.bf16.mxu0 %v940
    %2214 = vmatmul.mubr.bf16.gmra.mxu0 %v939
    %v2215 = vpop.f32.mrf.mxu0
    %v2216 = vadd.f32 0.0, %v2215
    %v2217 = vpop.f32.mrf.mxu0
    %v2218 = vadd.f32 0.0, %v2217
    %v2219 = vpop.f32.mrf.mxu0
    %v2220 = vadd.f32 0.0, %v2219
    %v2221 = vpop.f32.mrf.mxu0
    %v2222 = vadd.f32 0.0, %v2221
    %2223 = vdwg.mxu0
    %2224 = vmatprep.subr.bf16.mxu0 %v1852
    %2225 = vmatpush1.bf16.msra.mxu0 %v1851
    %2226 = vmatprep.subr.bf16.mxu0 %v1846
    %2227 = vmatpush1.bf16.msra.mxu0 %v1845
    %2228 = vmatprep.subr.bf16.mxu0 %v1840
    %2229 = vmatpush1.bf16.msra.mxu0 %v1839
    %2230 = vmatprep.subr.bf16.mxu0 %v1834
    %2231 = vmatpush1.bf16.msra.mxu0 %v1833
    %2232 = vmatprep.subr.bf16.mxu0 %v1828
    %2233 = vmatpush1.bf16.msra.mxu0 %v1827
    %2234 = vmatprep.subr.bf16.mxu0 %v1822
    %2235 = vmatpush1.bf16.msra.mxu0 %v1821
    %2236 = vmatprep.subr.bf16.mxu0 %v1816
    %2237 = vmatpush1.bf16.msra.mxu0 %v1815
    %2238 = vmatprep.subr.bf16.mxu0 %v1810
    %2239 = vmatpush1.bf16.msra.mxu0 %v1809
    %2240 = vmatprep.subr.bf16.mxu0 %v1900
    %2241 = vmatpush2.bf16.msra.mxu0 %v1899
    %2242 = vmatprep.subr.bf16.mxu0 %v1894
    %2243 = vmatpush2.bf16.msra.mxu0 %v1893
    %2244 = vmatprep.subr.bf16.mxu0 %v1888
    %2245 = vmatpush2.bf16.msra.mxu0 %v1887
    %2246 = vmatprep.subr.bf16.mxu0 %v1882
    %2247 = vmatpush2.bf16.msra.mxu0 %v1881
    %2248 = vmatprep.subr.bf16.mxu0 %v1876
    %2249 = vmatpush2.bf16.msra.mxu0 %v1875
    %2250 = vmatprep.subr.bf16.mxu0 %v1870
    %2251 = vmatpush2.bf16.msra.mxu0 %v1869
    %2252 = vmatprep.subr.bf16.mxu0 %v1864
    %2253 = vmatpush2.bf16.msra.mxu0 %v1863
    %2254 = vmatprep.subr.bf16.mxu0 %v1858
    %2255 = vmatpush2.bf16.msra.mxu0 %v1857
    %2256 = vmatprep.mubr.bf16.mxu0 %v942
    %2257 = vmatmul.mubr.bf16.gmra.mxu0 %v941
    %v2258 = vpop.f32.mrf.mxu0
    %v2259 = vadd.f32 %v2216, %v2258
    %v2260 = vpop.f32.mrf.mxu0
    %v2261 = vadd.f32 %v2218, %v2260
    %v2262 = vpop.f32.mrf.mxu0
    %v2263 = vadd.f32 %v2220, %v2262
    %v2264 = vpop.f32.mrf.mxu0
    %v2265 = vadd.f32 %v2222, %v2264
    %2266 = vdwg.mxu0
    %2267 = vmatprep.subr.bf16.mxu0 %v1758
    %2268 = vmatpush1.bf16.msra.mxu0 %v1757
    %2269 = vmatprep.subr.bf16.mxu0 %v1752
    %2270 = vmatpush1.bf16.msra.mxu0 %v1751
    %2271 = vmatprep.subr.bf16.mxu0 %v1746
    %2272 = vmatpush1.bf16.msra.mxu0 %v1745
    %2273 = vmatprep.subr.bf16.mxu0 %v1740
    %2274 = vmatpush1.bf16.msra.mxu0 %v1739
    %2275 = vmatprep.subr.bf16.mxu0 %v1734
    %2276 = vmatpush1.bf16.msra.mxu0 %v1733
    %2277 = vmatprep.subr.bf16.mxu0 %v1728
    %2278 = vmatpush1.bf16.msra.mxu0 %v1727
    %2279 = vmatprep.subr.bf16.mxu0 %v1722
    %2280 = vmatpush1.bf16.msra.mxu0 %v1721
    %2281 = vmatprep.subr.bf16.mxu0 %v1716
    %2282 = vmatpush1.bf16.msra.mxu0 %v1715
    %2283 = vmatprep.subr.bf16.mxu0 %v1806
    %2284 = vmatpush2.bf16.msra.mxu0 %v1805
    %2285 = vmatprep.subr.bf16.mxu0 %v1800
    %2286 = vmatpush2.bf16.msra.mxu0 %v1799
    %2287 = vmatprep.subr.bf16.mxu0 %v1794
    %2288 = vmatpush2.bf16.msra.mxu0 %v1793
    %2289 = vmatprep.subr.bf16.mxu0 %v1788
    %2290 = vmatpush2.bf16.msra.mxu0 %v1787
    %2291 = vmatprep.subr.bf16.mxu0 %v1782
    %2292 = vmatpush2.bf16.msra.mxu0 %v1781
    %2293 = vmatprep.subr.bf16.mxu0 %v1776
    %2294 = vmatpush2.bf16.msra.mxu0 %v1775
    %2295 = vmatprep.subr.bf16.mxu0 %v1770
    %2296 = vmatpush2.bf16.msra.mxu0 %v1769
    %2297 = vmatprep.subr.bf16.mxu0 %v1764
    %2298 = vmatpush2.bf16.msra.mxu0 %v1763
    %2299 = vmatprep.mubr.bf16.mxu0 %v940
    %2300 = vmatmul.mubr.bf16.gmra.mxu0 %v939
    %v2301 = vpop.f32.mrf.mxu0
    %v2302 = vadd.f32 0.0, %v2301
    %v2303 = vpop.f32.mrf.mxu0
    %v2304 = vadd.f32 0.0, %v2303
    %v2305 = vpop.f32.mrf.mxu0
    %v2306 = vadd.f32 0.0, %v2305
    %v2307 = vpop.f32.mrf.mxu0
    %v2308 = vadd.f32 0.0, %v2307
    %2309 = vdwg.mxu0
    %2310 = vmatprep.subr.bf16.mxu0 %v1854
    %2311 = vmatpush1.bf16.msra.mxu0 %v1853
    %2312 = vmatprep.subr.bf16.mxu0 %v1848
    %2313 = vmatpush1.bf16.msra.mxu0 %v1847
    %2314 = vmatprep.subr.bf16.mxu0 %v1842
    %2315 = vmatpush1.bf16.msra.mxu0 %v1841
    %2316 = vmatprep.subr.bf16.mxu0 %v1836
    %2317 = vmatpush1.bf16.msra.mxu0 %v1835
    %2318 = vmatprep.subr.bf16.mxu0 %v1830
    %2319 = vmatpush1.bf16.msra.mxu0 %v1829
    %2320 = vmatprep.subr.bf16.mxu0 %v1824
    %2321 = vmatpush1.bf16.msra.mxu0 %v1823
    %2322 = vmatprep.subr.bf16.mxu0 %v1818
    %2323 = vmatpush1.bf16.msra.mxu0 %v1817
    %2324 = vmatprep.subr.bf16.mxu0 %v1812
    %2325 = vmatpush1.bf16.msra.mxu0 %v1811
    %2326 = vmatprep.subr.bf16.mxu0 %v1902
    %2327 = vmatpush2.bf16.msra.mxu0 %v1901
    %2328 = vmatprep.subr.bf16.mxu0 %v1896
    %2329 = vmatpush2.bf16.msra.mxu0 %v1895
    %2330 = vmatprep.subr.bf16.mxu0 %v1890
    %2331 = vmatpush2.bf16.msra.mxu0 %v1889
    %2332 = vmatprep.subr.bf16.mxu0 %v1884
    %2333 = vmatpush2.bf16.msra.mxu0 %v1883
    %2334 = vmatprep.subr.bf16.mxu0 %v1878
    %2335 = vmatpush2.bf16.msra.mxu0 %v1877
    %2336 = vmatprep.subr.bf16.mxu0 %v1872
    %2337 = vmatpush2.bf16.msra.mxu0 %v1871
    %2338 = vmatprep.subr.bf16.mxu0 %v1866
    %2339 = vmatpush2.bf16.msra.mxu0 %v1865
    %2340 = vmatprep.subr.bf16.mxu0 %v1860
    %2341 = vmatpush2.bf16.msra.mxu0 %v1859
    %2342 = vmatprep.mubr.bf16.mxu0 %v942
    %2343 = vmatmul.mubr.bf16.gmra.mxu0 %v941
    %v2344 = vpop.f32.mrf.mxu0
    %v2345 = vadd.f32 %v2302, %v2344
    %v2346 = vpop.f32.mrf.mxu0
    %v2347 = vadd.f32 %v2304, %v2346
    %v2348 = vpop.f32.mrf.mxu0
    %v2349 = vadd.f32 %v2306, %v2348
    %v2350 = vpop.f32.mrf.mxu0
    %v2351 = vadd.f32 %v2308, %v2350
    %2352 = vdwg.mxu0
    %v2353 = vadd.f32 %v2173, %v2177
    %v2354 = vrot.slane %v2353, 4
    %v2355 = vadd.f32 %v2353, %v2354
    %v2356 = vrot.slane %v2355, 2
    %v2357 = vadd.f32 %v2355, %v2356
    %v2358 = vrot.slane %v2357, 1
    %v2359 = vadd.f32 %v2357, %v2358
    %v2360 = vadd.f32 %v2175, %v2179
    %v2361 = vrot.slane %v2360, 4
    %v2362 = vadd.f32 %v2360, %v2361
    %v2363 = vrot.slane %v2362, 2
    %v2364 = vadd.f32 %v2362, %v2363
    %v2365 = vrot.slane %v2364, 1
    %v2366 = vadd.f32 %v2364, %v2365
    %v2367 = vadd.f32 %v2259, %v2263
    %v2368 = vrot.slane %v2367, 4
    %v2369 = vadd.f32 %v2367, %v2368
    %v2370 = vrot.slane %v2369, 2
    %v2371 = vadd.f32 %v2369, %v2370
    %v2372 = vrot.slane %v2371, 1
    %v2373 = vadd.f32 %v2371, %v2372
    %v2374 = vadd.f32 %v2261, %v2265
    %v2375 = vrot.slane %v2374, 4
    %v2376 = vadd.f32 %v2374, %v2375
    %v2377 = vrot.slane %v2376, 2
    %v2378 = vadd.f32 %v2376, %v2377
    %v2379 = vrot.slane %v2378, 1
    %v2380 = vadd.f32 %v2378, %v2379
    %v2381 = vadd.f32 %v2345, %v2349
    %v2382 = vrot.slane %v2381, 4
    %v2383 = vadd.f32 %v2381, %v2382
    %v2384 = vrot.slane %v2383, 2
    %v2385 = vadd.f32 %v2383, %v2384
    %v2386 = vrot.slane %v2385, 1
    %v2387 = vadd.f32 %v2385, %v2386
    %v2388 = vadd.f32 %v2347, %v2351
    %v2389 = vrot.slane %v2388, 4
    %v2390 = vadd.f32 %v2388, %v2389
    %v2391 = vrot.slane %v2390, 2
    %v2392 = vadd.f32 %v2390, %v2391
    %v2393 = vrot.slane %v2392, 1
    %v2394 = vadd.f32 %v2392, %v2393
    %v2395 = vmul.f32 %v2359, %v210
    %v2396 = vmul.f32 %v2366, %v210
    %v2397 = vmul.f32 %v2373, %v210
    %v2398 = vmul.f32 %v2380, %v210
    %v2399 = vmul.f32 %v2387, %v210
    %v2400 = vmul.f32 %v2394, %v210
    %v2401 = vsub.f32 %v2173, %v2395
    %v2402 = vsub.f32 %v2175, %v2396
    %v2403 = vsub.f32 %v2259, %v2397
    %v2404 = vsub.f32 %v2261, %v2398
    %v2405 = vsub.f32 %v2345, %v2399
    %v2406 = vsub.f32 %v2347, %v2400
    %v2407 = vsub.f32 %v2177, %v2395
    %v2408 = vsub.f32 %v2179, %v2396
    %v2409 = vsub.f32 %v2263, %v2397
    %v2410 = vsub.f32 %v2265, %v2398
    %v2411 = vsub.f32 %v2349, %v2399
    %v2412 = vsub.f32 %v2351, %v2400
    %v2413 = vmul.f32 %v2401, %v2401
    %v2414 = vmul.f32 %v2402, %v2402
    %v2415 = vmul.f32 %v2403, %v2403
    %v2416 = vmul.f32 %v2404, %v2404
    %v2417 = vmul.f32 %v2405, %v2405
    %v2418 = vmul.f32 %v2406, %v2406
    %v2419 = vmul.f32 %v2407, %v2407
    %v2420 = vmul.f32 %v2408, %v2408
    %v2421 = vmul.f32 %v2409, %v2409
    %v2422 = vmul.f32 %v2410, %v2410
    %v2423 = vmul.f32 %v2411, %v2411
    %v2424 = vmul.f32 %v2412, %v2412
    %v2425 = vadd.f32 %v2413, %v2419
    %v2426 = vrot.slane %v2425, 4
    %v2427 = vadd.f32 %v2425, %v2426
    %v2428 = vrot.slane %v2427, 2
    %v2429 = vadd.f32 %v2427, %v2428
    %v2430 = vrot.slane %v2429, 1
    %v2431 = vadd.f32 %v2429, %v2430
    %v2432 = vadd.f32 %v2414, %v2420
    %v2433 = vrot.slane %v2432, 4
    %v2434 = vadd.f32 %v2432, %v2433
    %v2435 = vrot.slane %v2434, 2
    %v2436 = vadd.f32 %v2434, %v2435
    %v2437 = vrot.slane %v2436, 1
    %v2438 = vadd.f32 %v2436, %v2437
    %v2439 = vadd.f32 %v2415, %v2421
    %v2440 = vrot.slane %v2439, 4
    %v2441 = vadd.f32 %v2439, %v2440
    %v2442 = vrot.slane %v2441, 2
    %v2443 = vadd.f32 %v2441, %v2442
    %v2444 = vrot.slane %v2443, 1
    %v2445 = vadd.f32 %v2443, %v2444
    %v2446 = vadd.f32 %v2416, %v2422
    %v2447 = vrot.slane %v2446, 4
    %v2448 = vadd.f32 %v2446, %v2447
    %v2449 = vrot.slane %v2448, 2
    %v2450 = vadd.f32 %v2448, %v2449
    %v2451 = vrot.slane %v2450, 1
    %v2452 = vadd.f32 %v2450, %v2451
    %v2453 = vadd.f32 %v2417, %v2423
    %v2454 = vrot.slane %v2453, 4
    %v2455 = vadd.f32 %v2453, %v2454
    %v2456 = vrot.slane %v2455, 2
    %v2457 = vadd.f32 %v2455, %v2456
    %v2458 = vrot.slane %v2457, 1
    %v2459 = vadd.f32 %v2457, %v2458
    %v2460 = vadd.f32 %v2418, %v2424
    %v2461 = vrot.slane %v2460, 4
    %v2462 = vadd.f32 %v2460, %v2461
    %v2463 = vrot.slane %v2462, 2
    %v2464 = vadd.f32 %v2462, %v2463
    %v2465 = vrot.slane %v2464, 1
    %v2466 = vadd.f32 %v2464, %v2465
    %v2467 = vmul.f32 %v2431, %v210
    %v2468 = vmul.f32 %v2438, %v210
    %v2469 = vmul.f32 %v2445, %v210
    %v2470 = vmul.f32 %v2452, %v210
    %v2471 = vmul.f32 %v2459, %v210
    %v2472 = vmul.f32 %v2466, %v210
    %v2473 = vadd.f32 %v2467, 1e-05
    %v2474 = vadd.f32 %v2468, 1e-05
    %v2475 = vadd.f32 %v2469, 1e-05
    %v2476 = vadd.f32 %v2470, 1e-05
    %v2477 = vadd.f32 %v2471, 1e-05
    %v2478 = vadd.f32 %v2472, 1e-05
    %v2479 = vrsqrt.pop %v2473
    %v2480 = vrsqrt.pop %v2474
    %v2481 = vrsqrt.pop %v2475
    %v2482 = vrsqrt.pop %v2476
    %v2483 = vrsqrt.pop %v2477
    %v2484 = vrsqrt.pop %v2478
    %v2486 = vlaneseq
    %v2487 = vshrl.u32 %v2486, 7
    %v2488 = vsub.s32 0, %v2487
    %v2489 = vrot.slane %v88, %v2488
    %v2490 = vlaneseq
    %v2491 = vshrl.u32 %v2490, 7
    %v2492 = vsub.s32 1, %v2491
    %v2493 = vrot.slane %v88, %v2492
    %v2494 = vlaneseq
    %v2495 = vshrl.u32 %v2494, 7
    %v2496 = vsub.s32 2, %v2495
    %v2497 = vrot.slane %v88, %v2496
    %v2498 = vlaneseq
    %v2499 = vshrl.u32 %v2498, 7
    %v2500 = vsub.s32 3, %v2499
    %v2501 = vrot.slane %v88, %v2500
    %v2502 = vlaneseq
    %v2503 = vshrl.u32 %v2502, 7
    %v2504 = vsub.s32 4, %v2503
    %v2505 = vrot.slane %v88, %v2504
    %v2506 = vlaneseq
    %v2507 = vshrl.u32 %v2506, 7
    %v2508 = vsub.s32 5, %v2507
    %v2509 = vrot.slane %v88, %v2508
    %v2516 = vmul.f32 %v2479, %v2489
    %v2517 = vmul.f32 %v2480, %v2493
    %v2518 = vmul.f32 %v2481, %v2497
    %v2519 = vmul.f32 %v2482, %v2501
    %v2520 = vmul.f32 %v2483, %v2505
    %v2521 = vmul.f32 %v2484, %v2509
    %v2522 = vlaneseq
    %v2523 = vshrl.u32 %v2522, 7
    %v2524 = vsub.s32 0, %v2523
    %v2525 = vrot.slane %v2516, %v2524
    %v2526 = vlaneseq
    %v2527 = vshrl.u32 %v2526, 7
    %v2528 = vsub.s32 0, %v2527
    %v2529 = vrot.slane %v2517, %v2528
    %v2530 = vlaneseq
    %v2531 = vshrl.u32 %v2530, 7
    %v2532 = vsub.s32 0, %v2531
    %v2533 = vrot.slane %v2518, %v2532
    %v2534 = vlaneseq
    %v2535 = vshrl.u32 %v2534, 7
    %v2536 = vsub.s32 0, %v2535
    %v2537 = vrot.slane %v2519, %v2536
    %v2538 = vlaneseq
    %v2539 = vshrl.u32 %v2538, 7
    %v2540 = vsub.s32 0, %v2539
    %v2541 = vrot.slane %v2520, %v2540
    %v2542 = vlaneseq
    %v2543 = vshrl.u32 %v2542, 7
    %v2544 = vsub.s32 0, %v2543
    %v2545 = vrot.slane %v2521, %v2544
    %v2546 = vmul.f32 %v2401, %v2525
    %v2547 = vmul.f32 %v2402, %v2529
    %v2548 = vmul.f32 %v2403, %v2533
    %v2549 = vmul.f32 %v2404, %v2537
    %v2550 = vmul.f32 %v2405, %v2541
    %v2551 = vmul.f32 %v2406, %v2545
    %v2552 = vmul.f32 %v2407, %v2525
    %v2553 = vmul.f32 %v2408, %v2529
    %v2554 = vmul.f32 %v2409, %v2533
    %v2555 = vmul.f32 %v2410, %v2537
    %v2556 = vmul.f32 %v2411, %v2541
    %v2557 = vmul.f32 %v2412, %v2545
    %v2559 = vlaneseq
    %v2560 = vshrl.u32 %v2559, 7
    %v2561 = vsub.s32 0, %v2560
    %v2562 = vrot.slane %v90, %v2561
    %v2563 = vlaneseq
    %v2564 = vshrl.u32 %v2563, 7
    %v2565 = vsub.s32 1, %v2564
    %v2566 = vrot.slane %v90, %v2565
    %v2567 = vlaneseq
    %v2568 = vshrl.u32 %v2567, 7
    %v2569 = vsub.s32 2, %v2568
    %v2570 = vrot.slane %v90, %v2569
    %v2571 = vlaneseq
    %v2572 = vshrl.u32 %v2571, 7
    %v2573 = vsub.s32 3, %v2572
    %v2574 = vrot.slane %v90, %v2573
    %v2575 = vlaneseq
    %v2576 = vshrl.u32 %v2575, 7
    %v2577 = vsub.s32 4, %v2576
    %v2578 = vrot.slane %v90, %v2577
    %v2579 = vlaneseq
    %v2580 = vshrl.u32 %v2579, 7
    %v2581 = vsub.s32 5, %v2580
    %v2582 = vrot.slane %v90, %v2581
    %v2589 = vadd.f32 %v2546, %v2562
    %v2590 = vadd.f32 %v2547, %v2566
    %v2591 = vadd.f32 %v2548, %v2570
    %v2592 = vadd.f32 %v2549, %v2574
    %v2593 = vadd.f32 %v2550, %v2578
    %v2594 = vadd.f32 %v2551, %v2582
    %v2595 = vadd.f32 %v2552, %v2562
    %v2596 = vadd.f32 %v2553, %v2566
    %v2597 = vadd.f32 %v2554, %v2570
    %v2598 = vadd.f32 %v2555, %v2574
    %v2599 = vadd.f32 %v2556, %v2578
    %v2600 = vadd.f32 %v2557, %v2582
    %v2601 = vtanh.pop %v2589
    %v2602 = vtanh.pop %v2590
    %v2603 = vtanh.pop %v2591
    %v2604 = vtanh.pop %v2592
    %v2605 = vtanh.pop %v2593
    %v2606 = vtanh.pop %v2594
    %v2607 = vtanh.pop %v2595
    %v2608 = vtanh.pop %v2596
    %v2609 = vtanh.pop %v2597
    %v2610 = vtanh.pop %v2598
    %v2611 = vtanh.pop %v2599
    %v2612 = vtanh.pop %v2600
    %v2613 = vpack.c.bf16 %v2607, %v2601
    %v2614 = vpack.c.bf16 %v2608, %v2602
    %v2615 = vpack.c.bf16 %v2609, %v2603
    %v2616 = vpack.c.bf16 %v2610, %v2604
    %v2617 = vpack.c.bf16 %v2611, %v2605
    %v2618 = vpack.c.bf16 %v2612, %v2606
    %v2625 = vunpack.c.l.b16 %v2613
    %v2626 = vunpack.c.l.b16 %v2614
    %v2627 = vunpack.c.l.b16 %v2615
    %v2628 = vunpack.c.l.b16 %v2616
    %v2629 = vunpack.c.l.b16 %v2617
    %v2630 = vunpack.c.l.b16 %v2618
    %v2631 = vunpack.c.h.b16 %v2613
    %v2632 = vunpack.c.h.b16 %v2614
    %v2633 = vunpack.c.h.b16 %v2615
    %v2634 = vunpack.c.h.b16 %v2616
    %v2635 = vunpack.c.h.b16 %v2617
    %v2636 = vunpack.c.h.b16 %v2618
    %v2637 = vpack.c.b16 %v2626, %v2625
    %v2638 = vpack.c.b16 %v2628, %v2627
    %v2639 = vpack.c.b16 %v2630, %v2629
    %v2640 = vpack.c.b16 %v2632, %v2631
    %v2641 = vpack.c.b16 %v2634, %v2633
    %v2642 = vpack.c.b16 %v2636, %v2635
    %2649 = vst [vmem:[#allocation12] sm:$0xff] %v2637
    %2650 = vst [vmem:[#allocation12 + $0x8] sm:$0xff] %v2638
    %2651 = vst [vmem:[#allocation12 + $0x10] sm:$0xff] %v2639
    %2652 = vst [vmem:[#allocation12 + $0x18] sm:$0xff] %v2640
    %2653 = vst [vmem:[#allocation12 + $0x20] sm:$0xff] %v2641
    %2654 = vst [vmem:[#allocation12 + $0x28] sm:$0xff] %v2642
    // Predicated region
    $region34: #{tpu_custom_call.1} parent=1 // pred_check
      _
    $region35: #{tpu_custom_call.1} parent=1 // pred_check_branch
      %2656 = sbr.rel (0) target = $region37
    $region36: #{tpu_custom_call.1} parent=1 // pred_region
      %s2658 = ssub.s32 768, 768
      %2659 = vsyncadd [#allocation8], %s2658
      %s2660 = sshll.u32 [#allocation12], 4
      %s2661 = int_to_ptr.vmem [resolvable:$true] %s2660
      %2666 = dma.vmem_to_hbm [thread:$0]  %s2661, 768, %s5, [#allocation8], 384, 384, 24
    $region37: #{tpu_custom_call.1} parent=1 // pred_fallthru
      _
    // Predicated region
    $region38: #{tpu_custom_call.1} parent=1 // pred_check
      _
    $region39: #{tpu_custom_call.1} parent=1 // pred_check_branch
      %2668 = sbr.rel (0) target = $region41
    $region40: #{tpu_custom_call.1} parent=1 // pred_region
      %2669 = dma.done [#allocation8], 768
    $region41: #{tpu_custom_call.1} parent=1 // pred_fallthru
      _
    %2670 = vsyncpa [#allocation7], 1
    %2671 = vsyncpa [#allocation10], 1
    %2672 = vsyncpa [#allocation8], 1
  %2673 = vsyncmov [#allocation5]
  %s2674 = vpop.sfrf %2673
  %p2675 = scmp.eq.s32.totalorder %s2674, 0
  %p2676 = pneg %p2675
  %2678 = shalt.err (%p2676)
  %s2679 = scalar_lea.sflag [#allocation5], 1
  %2680 = vsyncmov %s2679
  %s2681 = vpop.sfrf %2680
  %p2682 = scmp.eq.s32.totalorder %s2681, 0
  %p2683 = pneg %p2682
  %2685 = shalt.err (%p2683)

</llo_original>
